<compile_context>
chip_gen: v7x
topology: tpu7x:2x2x1
jax: 0.10.0
libtpu: 0.0.40
codegen_flags: <defaults>
</compile_context>

<pallas_src>
import jax
import jax.numpy as jnp
from jax import lax
from jax.experimental import pallas as pl
from jax.experimental.pallas import tpu as pltpu

_BN_EPS = 1e-5


# ----------------------------- fused Pallas kernel ----------------------------- #

def _make_fused_tcn_kernel(layer_specs, K, L, E):
    """Full TCN forward for one batch element.

    Ref order: x, emb, per-layer [w1f, c1, w2f, c2, (wres, bres)], out,
               per-layer scratch [stg1 (K*cin, L), stg2 (K*(cout+E), L)].
    `layer_specs` is static Python: dicts of cin, cout, dil, identity.
    """

    def kernel(*refs):
        x_ref, emb_ref = refs[0], refs[1]
        idx = 2
        layer_wrefs = []
        for spec in layer_specs:
            n = 4 if spec["identity"] else 6
            layer_wrefs.append(refs[idx:idx + n])
            idx += n
        o_ref = refs[idx]
        scratch = refs[idx + 1:]

        x = x_ref[...]                                   # (cin0, L) f32
        emb = emb_ref[...]                               # (E, 1)   f32
        emb_row = jnp.broadcast_to(emb, (E, L))          # hoisted broadcast

        for li, spec in enumerate(layer_specs):
            cin, cout, dil = spec["cin"], spec["cout"], spec["dil"]
            pad = (K - 1) * dil // 2
            wr = layer_wrefs[li]
            w1_ref, c1_ref, w2_ref, c2_ref = wr[0], wr[1], wr[2], wr[3]
            stg1, stg2 = scratch[2 * li], scratch[2 * li + 1]
            C2 = cout + E

            # ---- conv1 (BN folded into weights) + ReLU --------------------
            # Stage K dilated time-shifted copies of x so the dilated conv is
            # a single MXU matmul: (cout, K*cin) @ (K*cin, L).
            stg1[...] = jnp.zeros_like(stg1)
            for k in range(K):                           # static unroll
                s = k * dil - pad
                lo, hi = max(0, s), L + min(0, s)
                if hi > lo:
                    dlo = max(0, -s)
                    stg1[k * cin:(k + 1) * cin, dlo:dlo + (hi - lo)] = x[:, lo:hi]
            h = jnp.dot(w1_ref[...], stg1[...],
                        preferred_element_type=jnp.float32) + c1_ref[...]
            h = jnp.maximum(h, 0.0)                      # (cout, L)

            # ---- conv2 over [h ; emb] (BN folded) + ReLU ------------------
            # Channel concat + zero time padding of the concat happen in VMEM
            # while staging — no HBM concat / broadcast / pad ops.
            stg2[...] = jnp.zeros_like(stg2)
            for k in range(K):
                s = k * dil - pad
                lo, hi = max(0, s), L + min(0, s)
                if hi > lo:
                    dlo = max(0, -s)
                    n_valid = hi - lo
                    stg2[k * C2:k * C2 + cout, dlo:dlo + n_valid] = h[:, lo:hi]
                    stg2[k * C2 + cout:(k + 1) * C2, dlo:dlo + n_valid] = \
                        emb_row[:, :n_valid]
            y = jnp.dot(w2_ref[...], stg2[...],
                        preferred_element_type=jnp.float32) + c2_ref[...]
            y = jnp.maximum(y, 0.0)                      # (cout, L)

            # ---- residual -------------------------------------------------
            if spec["identity"]:
                x = y + x                                # skip identity matmul
            else:
                wres_ref, bres_ref = wr[4], wr[5]
                x = y + jnp.dot(wres_ref[...], x,
                                preferred_element_type=jnp.float32) + bres_ref[...]

        o_ref[...] = x.astype(o_ref.dtype)

    return kernel


# ----------------------------- pallas_call wrapper ----------------------------- #

def make_tcn_forward(layer_specs, *, K, L, E):
    assert K % 2 == 1, "kernel_size must be odd for 'same' time padding"
    cin0 = layer_specs[0]["cin"]
    cout_f = layer_specs[-1]["cout"]
    kernel = _make_fused_tcn_kernel(layer_specs, K, L, E)

    in_specs = [
        pl.BlockSpec((None, cin0, L), lambda b: (b, 0, 0)),   # x
        pl.BlockSpec((None, E, 1), lambda b: (b, 0, 0)),      # emb as (B, E, 1)
    ]
    for spec in layer_specs:
        cin, cout = spec["cin"], spec["cout"]
        C2 = cout + E
        in_specs += [
            pl.BlockSpec((cout, K * cin), lambda b: (0, 0)),  # w1 (BN folded)
            pl.BlockSpec((cout, 1), lambda b: (0, 0)),        # c1 (bias+shift)
            pl.BlockSpec((cout, K * C2), lambda b: (0, 0)),   # w2 (BN folded)
            pl.BlockSpec((cout, 1), lambda b: (0, 0)),        # c2
        ]
        if not spec["identity"]:
            in_specs += [
                pl.BlockSpec((cout, cin), lambda b: (0, 0)),  # wres (1x1 conv)
                pl.BlockSpec((cout, 1), lambda b: (0, 0)),    # bres
            ]
    out_spec = pl.BlockSpec((None, cout_f, L), lambda b: (b, 0, 0))

    scratch_shapes = []
    for spec in layer_specs:
        scratch_shapes.append(pltpu.VMEM((K * spec["cin"], L), jnp.float32))
        scratch_shapes.append(pltpu.VMEM((K * (spec["cout"] + E), L), jnp.float32))

    def forward(x, emb, weights):
        B = x.shape[0]
        return pl.pallas_call(
            kernel,
            out_shape=jax.ShapeDtypeStruct((B, cout_f, L), jnp.float32),
            grid=(B,),
            in_specs=in_specs,
            out_specs=out_spec,
            scratch_shapes=scratch_shapes,
            compiler_params=pltpu.CompilerParams(
                dimension_semantics=("parallel",)),   # megacore sharding on v7x
        )(x, emb[:, :, None], *weights)

    return jax.jit(forward)


# ----------------------------- host-side param handling ----------------------------- #

def init_tcn_params(key, config):
    """Raw (PyTorch-layout) parameters + static per-layer specs."""
    Cin0 = config["input_channels"]
    H = config["hidden_channels"]
    Cout_f = config["output_channels"]
    nL = config["num_layers"]
    E = config["embedding_dim"]
    K = config["kernel_size"]

    raw_params, layer_specs = [], []
    cin = Cin0
    for i in range(nL):
        cout = H if i < nL - 1 else Cout_f
        identity = (cin == cout)
        key, *ks = jax.random.split(key, 15)
        p = dict(
            w1=0.2 * jax.random.normal(ks[0], (cout, cin, K), jnp.float32),
            b1=0.1 * jax.random.normal(ks[1], (cout,), jnp.float32),
            w2=0.2 * jax.random.normal(ks[2], (cout, cout + E, K), jnp.float32),
            b2=0.1 * jax.random.normal(ks[3], (cout,), jnp.float32),
            g1=1.0 + 0.1 * jax.random.normal(ks[4], (cout,), jnp.float32),
            be1=0.1 * jax.random.normal(ks[5], (cout,), jnp.float32),
            m1=0.1 * jax.random.normal(ks[6], (cout,), jnp.float32),
            v1=1.0 + 0.2 * jax.random.uniform(ks[7], (cout,), jnp.float32),
            g2=1.0 + 0.1 * jax.random.normal(ks[8], (cout,), jnp.float32),
            be2=0.1 * jax.random.normal(ks[9], (cout,), jnp.float32),
            m2=0.1 * jax.random.normal(ks[10], (cout,), jnp.float32),
            v2=1.0 + 0.2 * jax.random.uniform(ks[11], (cout,), jnp.float32),
        )
        if not identity:
            p["wres"] = 0.2 * jax.random.normal(ks[12], (cout, cin), jnp.float32)
            p["bres"] = 0.1 * jax.random.normal(ks[13], (cout,), jnp.float32)
        raw_params.append(p)
        layer_specs.append(dict(cin=cin, cout=cout, dil=2 ** i, identity=identity))
        cin = cout
    return raw_params, tuple(layer_specs)


def fold_tcn_params(raw_params, layer_specs, K, E):
    """Fold conv bias + eval-mode BN into the conv weights; flatten taps."""
    weights = []
    for p, spec in zip(raw_params, layer_specs):
        cin, cout = spec["cin"], spec["cout"]
        C2 = cout + E
        s1 = p["g1"] / jnp.sqrt(p["v1"] + _BN_EPS)
        t1 = p["be1"] - p["m1"] * s1
        # flat[o, k*cin + c] = scale[o] * w[o, c, k]
        w1f = (s1[:, None, None] * p["w1"]).transpose(0, 2, 1).reshape(cout, K * cin)
        c1 = (s1 * p["b1"] + t1)[:, None]
        s2 = p["g2"] / jnp.sqrt(p["v2"] + _BN_EPS)
        t2 = p["be2"] - p["m2"] * s2
        w2f = (s2[:, None, None] * p["w2"]).transpose(0, 2, 1).reshape(cout, K * C2)
        c2 = (s2 * p["b2"] + t2)[:, None]
        weights += [w1f.astype(jnp.float32), c1.astype(jnp.float32),
                    w2f.astype(jnp.float32), c2.astype(jnp.float32)]
        if not spec["identity"]:
            weights += [p["wres"].astype(jnp.float32),
                        p["bres"][:, None].astype(jnp.float32)]
    return weights


# ----------------------------- pure-JAX reference ----------------------------- #

def _conv1d_ref(x, w, b, dil, pad):
    y = lax.conv_general_dilated(
        x, w, window_strides=(1,), padding=[(pad, pad)],
        rhs_dilation=(dil,), dimension_numbers=("NCH", "OIH", "NCH"),
        precision=lax.Precision.HIGHEST)
    return y + b[None, :, None]


def _bn_ref(x, g, be, m, v):
    return g[None, :, None] * (x - m[None, :, None]) / \
        jnp.sqrt(v[None, :, None] + _BN_EPS) + be[None, :, None]


def tcn_ref(raw_params, layer_specs, x, emb, K):
    out = x
    for p, spec in zip(raw_params, layer_specs):
        dil = spec["dil"]
        pad = (K - 1) * dil // 2
        h = jax.nn.relu(_bn_ref(_conv1d_ref(out, p["w1"], p["b1"], dil, pad),
                                p["g1"], p["be1"], p["m1"], p["v1"]))
        emb_rep = jnp.broadcast_to(emb[:, :, None],
                                   (emb.shape[0], emb.shape[1], h.shape[-1]))
        cat = jnp.concatenate([h, emb_rep], axis=1)
        y = jax.nn.relu(_bn_ref(_conv1d_ref(cat, p["w2"], p["b2"], dil, pad),
                                p["g2"], p["be2"], p["m2"], p["v2"]))
        if spec["identity"]:
            res = out
        else:
            res = jnp.einsum("oc,bcl->bol", p["wres"], out,
                             precision=lax.Precision.HIGHEST) + p["bres"][None, :, None]
        out = y + res
    return out


# ----------------------------- main ----------------------------- #

if __name__ == "__main__":
    config = dict(
        input_channels=4,
        hidden_channels=8,
        output_channels=4,
        num_layers=3,
        embedding_dim=4,
        kernel_size=3,   # odd kernel -> "same" time length (as PyTorch padding implies)
    )
    B, L = 2, 16
    K, E = config["kernel_size"], config["embedding_dim"]

    key = jax.random.PRNGKey(0)
    k_p, k_x, k_e = jax.random.split(key, 3)
    raw_params, layer_specs = init_tcn_params(k_p, config)
    weights = fold_tcn_params(raw_params, layer_specs, K, E)

    x = jax.random.normal(k_x, (B, config["input_channels"], L), jnp.float32)
    emb = jax.random.normal(k_e, (B, E), jnp.float32)

    fwd = make_tcn_forward(layer_specs, K=K, L=L, E=E)
    out = jax.block_until_ready(fwd(x, emb, weights))

    ref = tcn_ref(raw_params, layer_specs, x, emb, K)
    assert out.shape == (B, config["output_channels"], L)
    err = float(jnp.max(jnp.abs(out - ref)))
    assert jnp.allclose(out, ref, rtol=1e-3, atol=1e-3), f"max abs err {err}"

    print("KERNEL_OK")
</pallas_src>

<mosaic_0001>
module attributes {stable_mosaic.version = 11 : i64} {
  func.func @kernel(%arg0: i32, %arg1: memref<1x4x16xf32, #tpu.memory_space<vmem>>, %arg2: memref<1x4x1xf32, #tpu.memory_space<vmem>>, %arg3: memref<8x12xf32, #tpu.memory_space<vmem>>, %arg4: memref<8x1xf32, #tpu.memory_space<vmem>>, %arg5: memref<8x36xf32, #tpu.memory_space<vmem>>, %arg6: memref<8x1xf32, #tpu.memory_space<vmem>>, %arg7: memref<8x4xf32, #tpu.memory_space<vmem>>, %arg8: memref<8x1xf32, #tpu.memory_space<vmem>>, %arg9: memref<8x24xf32, #tpu.memory_space<vmem>>, %arg10: memref<8x1xf32, #tpu.memory_space<vmem>>, %arg11: memref<8x36xf32, #tpu.memory_space<vmem>>, %arg12: memref<8x1xf32, #tpu.memory_space<vmem>>, %arg13: memref<4x24xf32, #tpu.memory_space<vmem>>, %arg14: memref<4x1xf32, #tpu.memory_space<vmem>>, %arg15: memref<4x24xf32, #tpu.memory_space<vmem>>, %arg16: memref<4x1xf32, #tpu.memory_space<vmem>>, %arg17: memref<4x8xf32, #tpu.memory_space<vmem>>, %arg18: memref<4x1xf32, #tpu.memory_space<vmem>>, %arg19: memref<1x4x16xf32, #tpu.memory_space<vmem>>, %arg20: memref<12x16xf32, #tpu.memory_space<vmem>>, %arg21: memref<36x16xf32, #tpu.memory_space<vmem>>, %arg22: memref<24x16xf32, #tpu.memory_space<vmem>>, %arg23: memref<36x16xf32, #tpu.memory_space<vmem>>, %arg24: memref<24x16xf32, #tpu.memory_space<vmem>>, %arg25: memref<24x16xf32, #tpu.memory_space<vmem>>) attributes {dimension_semantics = [#tpu.dimension_semantics<parallel>], iteration_bounds = array<i64: 2>, scalar_prefetch = 0 : i64, scratch_operands = 6 : i64, tpu.core_type = #tpu.core_type<tc>, window_params = [{transform_indices = @transform_0, window_bounds = array<i64: 1, 4, 16>}, {transform_indices = @transform_1, window_bounds = array<i64: 1, 4, 1>}, {pipeline_mode = #tpu.pipeline_mode<synchronous>, transform_indices = @transform_2, window_bounds = array<i64: 8, 12>}, {pipeline_mode = #tpu.pipeline_mode<synchronous>, transform_indices = @transform_3, window_bounds = array<i64: 8, 1>}, {pipeline_mode = #tpu.pipeline_mode<synchronous>, transform_indices = @transform_4, window_bounds = array<i64: 8, 36>}, {pipeline_mode = #tpu.pipeline_mode<synchronous>, transform_indices = @transform_5, window_bounds = array<i64: 8, 1>}, {pipeline_mode = #tpu.pipeline_mode<synchronous>, transform_indices = @transform_6, window_bounds = array<i64: 8, 4>}, {pipeline_mode = #tpu.pipeline_mode<synchronous>, transform_indices = @transform_7, window_bounds = array<i64: 8, 1>}, {pipeline_mode = #tpu.pipeline_mode<synchronous>, transform_indices = @transform_8, window_bounds = array<i64: 8, 24>}, {pipeline_mode = #tpu.pipeline_mode<synchronous>, transform_indices = @transform_9, window_bounds = array<i64: 8, 1>}, {pipeline_mode = #tpu.pipeline_mode<synchronous>, transform_indices = @transform_10, window_bounds = array<i64: 8, 36>}, {pipeline_mode = #tpu.pipeline_mode<synchronous>, transform_indices = @transform_11, window_bounds = array<i64: 8, 1>}, {pipeline_mode = #tpu.pipeline_mode<synchronous>, transform_indices = @transform_12, window_bounds = array<i64: 4, 24>}, {pipeline_mode = #tpu.pipeline_mode<synchronous>, transform_indices = @transform_13, window_bounds = array<i64: 4, 1>}, {pipeline_mode = #tpu.pipeline_mode<synchronous>, transform_indices = @transform_14, window_bounds = array<i64: 4, 24>}, {pipeline_mode = #tpu.pipeline_mode<synchronous>, transform_indices = @transform_15, window_bounds = array<i64: 4, 1>}, {pipeline_mode = #tpu.pipeline_mode<synchronous>, transform_indices = @transform_16, window_bounds = array<i64: 4, 8>}, {pipeline_mode = #tpu.pipeline_mode<synchronous>, transform_indices = @transform_17, window_bounds = array<i64: 4, 1>}, {transform_indices = @transform_18, window_bounds = array<i64: 1, 4, 16>}]} {
    %c0 = arith.constant 0 : index
    %c0_0 = arith.constant 0 : index
    %c0_1 = arith.constant 0 : index
    %0 = vector.load %arg1[%c0, %c0_0, %c0_1] : memref<1x4x16xf32, #tpu.memory_space<vmem>>, vector<1x4x16xf32>
    %1 = vector.shape_cast %0 : vector<1x4x16xf32> to vector<4x16xf32>
    %c0_2 = arith.constant 0 : index
    %c0_3 = arith.constant 0 : index
    %c0_4 = arith.constant 0 : index
    %2 = vector.load %arg2[%c0_2, %c0_3, %c0_4] : memref<1x4x1xf32, #tpu.memory_space<vmem>>, vector<1x4x1xf32>
    %3 = vector.shape_cast %2 : vector<1x4x1xf32> to vector<4x1xf32>
    %4 = vector.shape_cast %3 : vector<4x1xf32> to vector<4x1xf32>
    %5 = vector.broadcast %4 : vector<4x1xf32> to vector<4x16xf32>
    %cst = arith.constant 0.000000e+00 : f32
    %6 = vector.broadcast %cst : f32 to vector<12x16xf32>
    %c0_5 = arith.constant 0 : index
    %c0_6 = arith.constant 0 : index
    %7 = vector.load %arg20[%c0_5, %c0_6] : memref<12x16xf32, #tpu.memory_space<vmem>>, vector<12x16xf32>
    tpu.vector_store %arg20[%c0_5, %c0_6], %6 {strides = array<i32>} : memref<12x16xf32, #tpu.memory_space<vmem>>, vector<12x16xf32>,
    %8 = vector.extract_strided_slice %1 {offsets = [0, 0], sizes = [4, 15], strides = [1, 1]} : vector<4x16xf32> to vector<4x15xf32>
    %c0_7 = arith.constant 0 : index
    %c1 = arith.constant 1 : index
    %9 = vector.load %arg20[%c0_7, %c1] : memref<12x16xf32, #tpu.memory_space<vmem>>, vector<4x15xf32>
    tpu.vector_store %arg20[%c0_7, %c1], %8 {strides = array<i32>} : memref<12x16xf32, #tpu.memory_space<vmem>>, vector<4x15xf32>,
    %c4 = arith.constant 4 : index
    %c0_8 = arith.constant 0 : index
    %10 = vector.load %arg20[%c4, %c0_8] : memref<12x16xf32, #tpu.memory_space<vmem>>, vector<4x16xf32>
    tpu.vector_store %arg20[%c4, %c0_8], %1 {strides = array<i32>} : memref<12x16xf32, #tpu.memory_space<vmem>>, vector<4x16xf32>,
    %11 = vector.extract_strided_slice %1 {offsets = [0, 1], sizes = [4, 15], strides = [1, 1]} : vector<4x16xf32> to vector<4x15xf32>
    %c8 = arith.constant 8 : index
    %c0_9 = arith.constant 0 : index
    %12 = vector.load %arg20[%c8, %c0_9] : memref<12x16xf32, #tpu.memory_space<vmem>>, vector<4x15xf32>
    tpu.vector_store %arg20[%c8, %c0_9], %11 {strides = array<i32>} : memref<12x16xf32, #tpu.memory_space<vmem>>, vector<4x15xf32>,
    %c0_10 = arith.constant 0 : index
    %c0_11 = arith.constant 0 : index
    %13 = vector.load %arg3[%c0_10, %c0_11] : memref<8x12xf32, #tpu.memory_space<vmem>>, vector<8x12xf32>
    %c0_12 = arith.constant 0 : index
    %c0_13 = arith.constant 0 : index
    %14 = vector.load %arg20[%c0_12, %c0_13] : memref<12x16xf32, #tpu.memory_space<vmem>>, vector<12x16xf32>
    %cst_14 = arith.constant dense<0.000000e+00> : vector<8x16xf32>
    %15 = tpu.matmul %13, %14, %cst_14 {dimension_numbers = #tpu.dot_dimension_numbers<[1], [0], [0], [1], [0, 0, 1, 1], [], []>} : vector<8x12xf32>, vector<12x16xf32>, vector<8x16xf32> -> vector<8x16xf32>
    %c0_15 = arith.constant 0 : index
    %c0_16 = arith.constant 0 : index
    %16 = vector.load %arg4[%c0_15, %c0_16] : memref<8x1xf32, #tpu.memory_space<vmem>>, vector<8x1xf32>
    %17 = vector.broadcast %16 : vector<8x1xf32> to vector<8x16xf32>
    %18 = arith.addf %15, %17 : vector<8x16xf32>
    %cst_17 = arith.constant 0.000000e+00 : f32
    %19 = vector.broadcast %cst_17 : f32 to vector<8x16xf32>
    %20 = arith.maximumf %18, %19 : vector<8x16xf32>
    %cst_18 = arith.constant 0.000000e+00 : f32
    %21 = vector.broadcast %cst_18 : f32 to vector<36x16xf32>
    %c0_19 = arith.constant 0 : index
    %c0_20 = arith.constant 0 : index
    %22 = vector.load %arg21[%c0_19, %c0_20] : memref<36x16xf32, #tpu.memory_space<vmem>>, vector<36x16xf32>
    tpu.vector_store %arg21[%c0_19, %c0_20], %21 {strides = array<i32>} : memref<36x16xf32, #tpu.memory_space<vmem>>, vector<36x16xf32>,
    %23 = vector.extract_strided_slice %20 {offsets = [0, 0], sizes = [8, 15], strides = [1, 1]} : vector<8x16xf32> to vector<8x15xf32>
    %c0_21 = arith.constant 0 : index
    %c1_22 = arith.constant 1 : index
    %24 = vector.load %arg21[%c0_21, %c1_22] : memref<36x16xf32, #tpu.memory_space<vmem>>, vector<8x15xf32>
    tpu.vector_store %arg21[%c0_21, %c1_22], %23 {strides = array<i32>} : memref<36x16xf32, #tpu.memory_space<vmem>>, vector<8x15xf32>,
    %25 = vector.extract_strided_slice %5 {offsets = [0, 0], sizes = [4, 15], strides = [1, 1]} : vector<4x16xf32> to vector<4x15xf32>
    %c8_23 = arith.constant 8 : index
    %c1_24 = arith.constant 1 : index
    %26 = vector.load %arg21[%c8_23, %c1_24] : memref<36x16xf32, #tpu.memory_space<vmem>>, vector<4x15xf32>
    tpu.vector_store %arg21[%c8_23, %c1_24], %25 {strides = array<i32>} : memref<36x16xf32, #tpu.memory_space<vmem>>, vector<4x15xf32>,
    %c12 = arith.constant 12 : index
    %c0_25 = arith.constant 0 : index
    %27 = vector.load %arg21[%c12, %c0_25] : memref<36x16xf32, #tpu.memory_space<vmem>>, vector<8x16xf32>
    tpu.vector_store %arg21[%c12, %c0_25], %20 {strides = array<i32>} : memref<36x16xf32, #tpu.memory_space<vmem>>, vector<8x16xf32>,
    %c20 = arith.constant 20 : index
    %c0_26 = arith.constant 0 : index
    %28 = vector.load %arg21[%c20, %c0_26] : memref<36x16xf32, #tpu.memory_space<vmem>>, vector<4x16xf32>
    tpu.vector_store %arg21[%c20, %c0_26], %5 {strides = array<i32>} : memref<36x16xf32, #tpu.memory_space<vmem>>, vector<4x16xf32>,
    %29 = vector.extract_strided_slice %20 {offsets = [0, 1], sizes = [8, 15], strides = [1, 1]} : vector<8x16xf32> to vector<8x15xf32>
    %c24 = arith.constant 24 : index
    %c0_27 = arith.constant 0 : index
    %30 = vector.load %arg21[%c24, %c0_27] : memref<36x16xf32, #tpu.memory_space<vmem>>, vector<8x15xf32>
    tpu.vector_store %arg21[%c24, %c0_27], %29 {strides = array<i32>} : memref<36x16xf32, #tpu.memory_space<vmem>>, vector<8x15xf32>,
    %31 = vector.extract_strided_slice %5 {offsets = [0, 0], sizes = [4, 15], strides = [1, 1]} : vector<4x16xf32> to vector<4x15xf32>
    %c32 = arith.constant 32 : index
    %c0_28 = arith.constant 0 : index
    %32 = vector.load %arg21[%c32, %c0_28] : memref<36x16xf32, #tpu.memory_space<vmem>>, vector<4x15xf32>
    tpu.vector_store %arg21[%c32, %c0_28], %31 {strides = array<i32>} : memref<36x16xf32, #tpu.memory_space<vmem>>, vector<4x15xf32>,
    %c0_29 = arith.constant 0 : index
    %c0_30 = arith.constant 0 : index
    %33 = vector.load %arg5[%c0_29, %c0_30] : memref<8x36xf32, #tpu.memory_space<vmem>>, vector<8x36xf32>
    %c0_31 = arith.constant 0 : index
    %c0_32 = arith.constant 0 : index
    %34 = vector.load %arg21[%c0_31, %c0_32] : memref<36x16xf32, #tpu.memory_space<vmem>>, vector<36x16xf32>
    %cst_33 = arith.constant dense<0.000000e+00> : vector<8x16xf32>
    %35 = tpu.matmul %33, %34, %cst_33 {dimension_numbers = #tpu.dot_dimension_numbers<[1], [0], [0], [1], [0, 0, 1, 1], [], []>} : vector<8x36xf32>, vector<36x16xf32>, vector<8x16xf32> -> vector<8x16xf32>
    %c0_34 = arith.constant 0 : index
    %c0_35 = arith.constant 0 : index
    %36 = vector.load %arg6[%c0_34, %c0_35] : memref<8x1xf32, #tpu.memory_space<vmem>>, vector<8x1xf32>
    %37 = vector.broadcast %36 : vector<8x1xf32> to vector<8x16xf32>
    %38 = arith.addf %35, %37 : vector<8x16xf32>
    %cst_36 = arith.constant 0.000000e+00 : f32
    %39 = vector.broadcast %cst_36 : f32 to vector<8x16xf32>
    %40 = arith.maximumf %38, %39 : vector<8x16xf32>
    %c0_37 = arith.constant 0 : index
    %c0_38 = arith.constant 0 : index
    %41 = vector.load %arg7[%c0_37, %c0_38] : memref<8x4xf32, #tpu.memory_space<vmem>>, vector<8x4xf32>
    %cst_39 = arith.constant dense<0.000000e+00> : vector<8x16xf32>
    %42 = tpu.matmul %41, %1, %cst_39 {dimension_numbers = #tpu.dot_dimension_numbers<[1], [0], [0], [1], [0, 0, 1, 1], [], []>} : vector<8x4xf32>, vector<4x16xf32>, vector<8x16xf32> -> vector<8x16xf32>
    %43 = arith.addf %40, %42 : vector<8x16xf32>
    %c0_40 = arith.constant 0 : index
    %c0_41 = arith.constant 0 : index
    %44 = vector.load %arg8[%c0_40, %c0_41] : memref<8x1xf32, #tpu.memory_space<vmem>>, vector<8x1xf32>
    %45 = vector.broadcast %44 : vector<8x1xf32> to vector<8x16xf32>
    %46 = arith.addf %43, %45 : vector<8x16xf32>
    %cst_42 = arith.constant 0.000000e+00 : f32
    %47 = vector.broadcast %cst_42 : f32 to vector<24x16xf32>
    %c0_43 = arith.constant 0 : index
    %c0_44 = arith.constant 0 : index
    %48 = vector.load %arg22[%c0_43, %c0_44] : memref<24x16xf32, #tpu.memory_space<vmem>>, vector<24x16xf32>
    tpu.vector_store %arg22[%c0_43, %c0_44], %47 {strides = array<i32>} : memref<24x16xf32, #tpu.memory_space<vmem>>, vector<24x16xf32>,
    %49 = vector.extract_strided_slice %46 {offsets = [0, 0], sizes = [8, 14], strides = [1, 1]} : vector<8x16xf32> to vector<8x14xf32>
    %c0_45 = arith.constant 0 : index
    %c2 = arith.constant 2 : index
    %50 = vector.load %arg22[%c0_45, %c2] : memref<24x16xf32, #tpu.memory_space<vmem>>, vector<8x14xf32>
    tpu.vector_store %arg22[%c0_45, %c2], %49 {strides = array<i32>} : memref<24x16xf32, #tpu.memory_space<vmem>>, vector<8x14xf32>,
    %c8_46 = arith.constant 8 : index
    %c0_47 = arith.constant 0 : index
    %51 = vector.load %arg22[%c8_46, %c0_47] : memref<24x16xf32, #tpu.memory_space<vmem>>, vector<8x16xf32>
    tpu.vector_store %arg22[%c8_46, %c0_47], %46 {strides = array<i32>} : memref<24x16xf32, #tpu.memory_space<vmem>>, vector<8x16xf32>,
    %52 = vector.extract_strided_slice %46 {offsets = [0, 2], sizes = [8, 14], strides = [1, 1]} : vector<8x16xf32> to vector<8x14xf32>
    %c16 = arith.constant 16 : index
    %c0_48 = arith.constant 0 : index
    %53 = vector.load %arg22[%c16, %c0_48] : memref<24x16xf32, #tpu.memory_space<vmem>>, vector<8x14xf32>
    tpu.vector_store %arg22[%c16, %c0_48], %52 {strides = array<i32>} : memref<24x16xf32, #tpu.memory_space<vmem>>, vector<8x14xf32>,
    %c0_49 = arith.constant 0 : index
    %c0_50 = arith.constant 0 : index
    %54 = vector.load %arg9[%c0_49, %c0_50] : memref<8x24xf32, #tpu.memory_space<vmem>>, vector<8x24xf32>
    %c0_51 = arith.constant 0 : index
    %c0_52 = arith.constant 0 : index
    %55 = vector.load %arg22[%c0_51, %c0_52] : memref<24x16xf32, #tpu.memory_space<vmem>>, vector<24x16xf32>
    %cst_53 = arith.constant dense<0.000000e+00> : vector<8x16xf32>
    %56 = tpu.matmul %54, %55, %cst_53 {dimension_numbers = #tpu.dot_dimension_numbers<[1], [0], [0], [1], [0, 0, 1, 1], [], []>} : vector<8x24xf32>, vector<24x16xf32>, vector<8x16xf32> -> vector<8x16xf32>
    %c0_54 = arith.constant 0 : index
    %c0_55 = arith.constant 0 : index
    %57 = vector.load %arg10[%c0_54, %c0_55] : memref<8x1xf32, #tpu.memory_space<vmem>>, vector<8x1xf32>
    %58 = vector.broadcast %57 : vector<8x1xf32> to vector<8x16xf32>
    %59 = arith.addf %56, %58 : vector<8x16xf32>
    %cst_56 = arith.constant 0.000000e+00 : f32
    %60 = vector.broadcast %cst_56 : f32 to vector<8x16xf32>
    %61 = arith.maximumf %59, %60 : vector<8x16xf32>
    %cst_57 = arith.constant 0.000000e+00 : f32
    %62 = vector.broadcast %cst_57 : f32 to vector<36x16xf32>
    %c0_58 = arith.constant 0 : index
    %c0_59 = arith.constant 0 : index
    %63 = vector.load %arg23[%c0_58, %c0_59] : memref<36x16xf32, #tpu.memory_space<vmem>>, vector<36x16xf32>
    tpu.vector_store %arg23[%c0_58, %c0_59], %62 {strides = array<i32>} : memref<36x16xf32, #tpu.memory_space<vmem>>, vector<36x16xf32>,
    %64 = vector.extract_strided_slice %61 {offsets = [0, 0], sizes = [8, 14], strides = [1, 1]} : vector<8x16xf32> to vector<8x14xf32>
    %c0_60 = arith.constant 0 : index
    %c2_61 = arith.constant 2 : index
    %65 = vector.load %arg23[%c0_60, %c2_61] : memref<36x16xf32, #tpu.memory_space<vmem>>, vector<8x14xf32>
    tpu.vector_store %arg23[%c0_60, %c2_61], %64 {strides = array<i32>} : memref<36x16xf32, #tpu.memory_space<vmem>>, vector<8x14xf32>,
    %66 = vector.extract_strided_slice %5 {offsets = [0, 0], sizes = [4, 14], strides = [1, 1]} : vector<4x16xf32> to vector<4x14xf32>
    %c8_62 = arith.constant 8 : index
    %c2_63 = arith.constant 2 : index
    %67 = vector.load %arg23[%c8_62, %c2_63] : memref<36x16xf32, #tpu.memory_space<vmem>>, vector<4x14xf32>
    tpu.vector_store %arg23[%c8_62, %c2_63], %66 {strides = array<i32>} : memref<36x16xf32, #tpu.memory_space<vmem>>, vector<4x14xf32>,
    %c12_64 = arith.constant 12 : index
    %c0_65 = arith.constant 0 : index
    %68 = vector.load %arg23[%c12_64, %c0_65] : memref<36x16xf32, #tpu.memory_space<vmem>>, vector<8x16xf32>
    tpu.vector_store %arg23[%c12_64, %c0_65], %61 {strides = array<i32>} : memref<36x16xf32, #tpu.memory_space<vmem>>, vector<8x16xf32>,
    %c20_66 = arith.constant 20 : index
    %c0_67 = arith.constant 0 : index
    %69 = vector.load %arg23[%c20_66, %c0_67] : memref<36x16xf32, #tpu.memory_space<vmem>>, vector<4x16xf32>
    tpu.vector_store %arg23[%c20_66, %c0_67], %5 {strides = array<i32>} : memref<36x16xf32, #tpu.memory_space<vmem>>, vector<4x16xf32>,
    %70 = vector.extract_strided_slice %61 {offsets = [0, 2], sizes = [8, 14], strides = [1, 1]} : vector<8x16xf32> to vector<8x14xf32>
    %c24_68 = arith.constant 24 : index
    %c0_69 = arith.constant 0 : index
    %71 = vector.load %arg23[%c24_68, %c0_69] : memref<36x16xf32, #tpu.memory_space<vmem>>, vector<8x14xf32>
    tpu.vector_store %arg23[%c24_68, %c0_69], %70 {strides = array<i32>} : memref<36x16xf32, #tpu.memory_space<vmem>>, vector<8x14xf32>,
    %72 = vector.extract_strided_slice %5 {offsets = [0, 0], sizes = [4, 14], strides = [1, 1]} : vector<4x16xf32> to vector<4x14xf32>
    %c32_70 = arith.constant 32 : index
    %c0_71 = arith.constant 0 : index
    %73 = vector.load %arg23[%c32_70, %c0_71] : memref<36x16xf32, #tpu.memory_space<vmem>>, vector<4x14xf32>
    tpu.vector_store %arg23[%c32_70, %c0_71], %72 {strides = array<i32>} : memref<36x16xf32, #tpu.memory_space<vmem>>, vector<4x14xf32>,
    %c0_72 = arith.constant 0 : index
    %c0_73 = arith.constant 0 : index
    %74 = vector.load %arg11[%c0_72, %c0_73] : memref<8x36xf32, #tpu.memory_space<vmem>>, vector<8x36xf32>
    %c0_74 = arith.constant 0 : index
    %c0_75 = arith.constant 0 : index
    %75 = vector.load %arg23[%c0_74, %c0_75] : memref<36x16xf32, #tpu.memory_space<vmem>>, vector<36x16xf32>
    %cst_76 = arith.constant dense<0.000000e+00> : vector<8x16xf32>
    %76 = tpu.matmul %74, %75, %cst_76 {dimension_numbers = #tpu.dot_dimension_numbers<[1], [0], [0], [1], [0, 0, 1, 1], [], []>} : vector<8x36xf32>, vector<36x16xf32>, vector<8x16xf32> -> vector<8x16xf32>
    %c0_77 = arith.constant 0 : index
    %c0_78 = arith.constant 0 : index
    %77 = vector.load %arg12[%c0_77, %c0_78] : memref<8x1xf32, #tpu.memory_space<vmem>>, vector<8x1xf32>
    %78 = vector.broadcast %77 : vector<8x1xf32> to vector<8x16xf32>
    %79 = arith.addf %76, %78 : vector<8x16xf32>
    %cst_79 = arith.constant 0.000000e+00 : f32
    %80 = vector.broadcast %cst_79 : f32 to vector<8x16xf32>
    %81 = arith.maximumf %79, %80 : vector<8x16xf32>
    %82 = arith.addf %81, %46 : vector<8x16xf32>
    %cst_80 = arith.constant 0.000000e+00 : f32
    %83 = vector.broadcast %cst_80 : f32 to vector<24x16xf32>
    %c0_81 = arith.constant 0 : index
    %c0_82 = arith.constant 0 : index
    %84 = vector.load %arg24[%c0_81, %c0_82] : memref<24x16xf32, #tpu.memory_space<vmem>>, vector<24x16xf32>
    tpu.vector_store %arg24[%c0_81, %c0_82], %83 {strides = array<i32>} : memref<24x16xf32, #tpu.memory_space<vmem>>, vector<24x16xf32>,
    %85 = vector.extract_strided_slice %82 {offsets = [0, 0], sizes = [8, 12], strides = [1, 1]} : vector<8x16xf32> to vector<8x12xf32>
    %c0_83 = arith.constant 0 : index
    %c4_84 = arith.constant 4 : index
    %86 = vector.load %arg24[%c0_83, %c4_84] : memref<24x16xf32, #tpu.memory_space<vmem>>, vector<8x12xf32>
    tpu.vector_store %arg24[%c0_83, %c4_84], %85 {strides = array<i32>} : memref<24x16xf32, #tpu.memory_space<vmem>>, vector<8x12xf32>,
    %c8_85 = arith.constant 8 : index
    %c0_86 = arith.constant 0 : index
    %87 = vector.load %arg24[%c8_85, %c0_86] : memref<24x16xf32, #tpu.memory_space<vmem>>, vector<8x16xf32>
    tpu.vector_store %arg24[%c8_85, %c0_86], %82 {strides = array<i32>} : memref<24x16xf32, #tpu.memory_space<vmem>>, vector<8x16xf32>,
    %88 = vector.extract_strided_slice %82 {offsets = [0, 4], sizes = [8, 12], strides = [1, 1]} : vector<8x16xf32> to vector<8x12xf32>
    %c16_87 = arith.constant 16 : index
    %c0_88 = arith.constant 0 : index
    %89 = vector.load %arg24[%c16_87, %c0_88] : memref<24x16xf32, #tpu.memory_space<vmem>>, vector<8x12xf32>
    tpu.vector_store %arg24[%c16_87, %c0_88], %88 {strides = array<i32>} : memref<24x16xf32, #tpu.memory_space<vmem>>, vector<8x12xf32>,
    %c0_89 = arith.constant 0 : index
    %c0_90 = arith.constant 0 : index
    %90 = vector.load %arg13[%c0_89, %c0_90] : memref<4x24xf32, #tpu.memory_space<vmem>>, vector<4x24xf32>
    %c0_91 = arith.constant 0 : index
    %c0_92 = arith.constant 0 : index
    %91 = vector.load %arg24[%c0_91, %c0_92] : memref<24x16xf32, #tpu.memory_space<vmem>>, vector<24x16xf32>
    %cst_93 = arith.constant dense<0.000000e+00> : vector<4x16xf32>
    %92 = tpu.matmul %90, %91, %cst_93 {dimension_numbers = #tpu.dot_dimension_numbers<[1], [0], [0], [1], [0, 0, 1, 1], [], []>} : vector<4x24xf32>, vector<24x16xf32>, vector<4x16xf32> -> vector<4x16xf32>
    %c0_94 = arith.constant 0 : index
    %c0_95 = arith.constant 0 : index
    %93 = vector.load %arg14[%c0_94, %c0_95] : memref<4x1xf32, #tpu.memory_space<vmem>>, vector<4x1xf32>
    %94 = vector.broadcast %93 : vector<4x1xf32> to vector<4x16xf32>
    %95 = arith.addf %92, %94 : vector<4x16xf32>
    %cst_96 = arith.constant 0.000000e+00 : f32
    %96 = vector.broadcast %cst_96 : f32 to vector<4x16xf32>
    %97 = arith.maximumf %95, %96 : vector<4x16xf32>
    %cst_97 = arith.constant 0.000000e+00 : f32
    %98 = vector.broadcast %cst_97 : f32 to vector<24x16xf32>
    %c0_98 = arith.constant 0 : index
    %c0_99 = arith.constant 0 : index
    %99 = vector.load %arg25[%c0_98, %c0_99] : memref<24x16xf32, #tpu.memory_space<vmem>>, vector<24x16xf32>
    tpu.vector_store %arg25[%c0_98, %c0_99], %98 {strides = array<i32>} : memref<24x16xf32, #tpu.memory_space<vmem>>, vector<24x16xf32>,
    %100 = vector.extract_strided_slice %97 {offsets = [0, 0], sizes = [4, 12], strides = [1, 1]} : vector<4x16xf32> to vector<4x12xf32>
    %c0_100 = arith.constant 0 : index
    %c4_101 = arith.constant 4 : index
    %101 = vector.load %arg25[%c0_100, %c4_101] : memref<24x16xf32, #tpu.memory_space<vmem>>, vector<4x12xf32>
    tpu.vector_store %arg25[%c0_100, %c4_101], %100 {strides = array<i32>} : memref<24x16xf32, #tpu.memory_space<vmem>>, vector<4x12xf32>,
    %102 = vector.extract_strided_slice %5 {offsets = [0, 0], sizes = [4, 12], strides = [1, 1]} : vector<4x16xf32> to vector<4x12xf32>
    %c4_102 = arith.constant 4 : index
    %c4_103 = arith.constant 4 : index
    %103 = vector.load %arg25[%c4_102, %c4_103] : memref<24x16xf32, #tpu.memory_space<vmem>>, vector<4x12xf32>
    tpu.vector_store %arg25[%c4_102, %c4_103], %102 {strides = array<i32>} : memref<24x16xf32, #tpu.memory_space<vmem>>, vector<4x12xf32>,
    %c8_104 = arith.constant 8 : index
    %c0_105 = arith.constant 0 : index
    %104 = vector.load %arg25[%c8_104, %c0_105] : memref<24x16xf32, #tpu.memory_space<vmem>>, vector<4x16xf32>
    tpu.vector_store %arg25[%c8_104, %c0_105], %97 {strides = array<i32>} : memref<24x16xf32, #tpu.memory_space<vmem>>, vector<4x16xf32>,
    %c12_106 = arith.constant 12 : index
    %c0_107 = arith.constant 0 : index
    %105 = vector.load %arg25[%c12_106, %c0_107] : memref<24x16xf32, #tpu.memory_space<vmem>>, vector<4x16xf32>
    tpu.vector_store %arg25[%c12_106, %c0_107], %5 {strides = array<i32>} : memref<24x16xf32, #tpu.memory_space<vmem>>, vector<4x16xf32>,
    %106 = vector.extract_strided_slice %97 {offsets = [0, 4], sizes = [4, 12], strides = [1, 1]} : vector<4x16xf32> to vector<4x12xf32>
    %c16_108 = arith.constant 16 : index
    %c0_109 = arith.constant 0 : index
    %107 = vector.load %arg25[%c16_108, %c0_109] : memref<24x16xf32, #tpu.memory_space<vmem>>, vector<4x12xf32>
    tpu.vector_store %arg25[%c16_108, %c0_109], %106 {strides = array<i32>} : memref<24x16xf32, #tpu.memory_space<vmem>>, vector<4x12xf32>,
    %108 = vector.extract_strided_slice %5 {offsets = [0, 0], sizes = [4, 12], strides = [1, 1]} : vector<4x16xf32> to vector<4x12xf32>
    %c20_110 = arith.constant 20 : index
    %c0_111 = arith.constant 0 : index
    %109 = vector.load %arg25[%c20_110, %c0_111] : memref<24x16xf32, #tpu.memory_space<vmem>>, vector<4x12xf32>
    tpu.vector_store %arg25[%c20_110, %c0_111], %108 {strides = array<i32>} : memref<24x16xf32, #tpu.memory_space<vmem>>, vector<4x12xf32>,
    %c0_112 = arith.constant 0 : index
    %c0_113 = arith.constant 0 : index
    %110 = vector.load %arg15[%c0_112, %c0_113] : memref<4x24xf32, #tpu.memory_space<vmem>>, vector<4x24xf32>
    %c0_114 = arith.constant 0 : index
    %c0_115 = arith.constant 0 : index
    %111 = vector.load %arg25[%c0_114, %c0_115] : memref<24x16xf32, #tpu.memory_space<vmem>>, vector<24x16xf32>
    %cst_116 = arith.constant dense<0.000000e+00> : vector<4x16xf32>
    %112 = tpu.matmul %110, %111, %cst_116 {dimension_numbers = #tpu.dot_dimension_numbers<[1], [0], [0], [1], [0, 0, 1, 1], [], []>} : vector<4x24xf32>, vector<24x16xf32>, vector<4x16xf32> -> vector<4x16xf32>
    %c0_117 = arith.constant 0 : index
    %c0_118 = arith.constant 0 : index
    %113 = vector.load %arg16[%c0_117, %c0_118] : memref<4x1xf32, #tpu.memory_space<vmem>>, vector<4x1xf32>
    %114 = vector.broadcast %113 : vector<4x1xf32> to vector<4x16xf32>
    %115 = arith.addf %112, %114 : vector<4x16xf32>
    %cst_119 = arith.constant 0.000000e+00 : f32
    %116 = vector.broadcast %cst_119 : f32 to vector<4x16xf32>
    %117 = arith.maximumf %115, %116 : vector<4x16xf32>
    %c0_120 = arith.constant 0 : index
    %c0_121 = arith.constant 0 : index
    %118 = vector.load %arg17[%c0_120, %c0_121] : memref<4x8xf32, #tpu.memory_space<vmem>>, vector<4x8xf32>
    %cst_122 = arith.constant dense<0.000000e+00> : vector<4x16xf32>
    %119 = tpu.matmul %118, %82, %cst_122 {dimension_numbers = #tpu.dot_dimension_numbers<[1], [0], [0], [1], [0, 0, 1, 1], [], []>} : vector<4x8xf32>, vector<8x16xf32>, vector<4x16xf32> -> vector<4x16xf32>
    %120 = arith.addf %117, %119 : vector<4x16xf32>
    %c0_123 = arith.constant 0 : index
    %c0_124 = arith.constant 0 : index
    %121 = vector.load %arg18[%c0_123, %c0_124] : memref<4x1xf32, #tpu.memory_space<vmem>>, vector<4x1xf32>
    %122 = vector.broadcast %121 : vector<4x1xf32> to vector<4x16xf32>
    %123 = arith.addf %120, %122 : vector<4x16xf32>
    %c0_125 = arith.constant 0 : index
    %c0_126 = arith.constant 0 : index
    %c0_127 = arith.constant 0 : index
    %124 = vector.load %arg19[%c0_125, %c0_126, %c0_127] : memref<1x4x16xf32, #tpu.memory_space<vmem>>, vector<1x4x16xf32>
    %125 = vector.shape_cast %124 : vector<1x4x16xf32> to vector<4x16xf32>
    %126 = vector.shape_cast %123 : vector<4x16xf32> to vector<1x4x16xf32>
    tpu.vector_store %arg19[%c0_125, %c0_126, %c0_127], %126 {strides = array<i32>} : memref<1x4x16xf32, #tpu.memory_space<vmem>>, vector<1x4x16xf32>,
    return
  }
  func.func @transform_0(%arg0: i32) -> (i32, i32, i32) {
    %c0_i32 = arith.constant 0 : i32
    %c0_i32_0 = arith.constant 0 : i32
    %c0_i32_1 = arith.constant 0 : i32
    return %arg0, %c0_i32, %c0_i32_0 : i32, i32, i32
  }
  func.func @transform_1(%arg0: i32) -> (i32, i32, i32) {
    %c0_i32 = arith.constant 0 : i32
    %c0_i32_0 = arith.constant 0 : i32
    %c0_i32_1 = arith.constant 0 : i32
    return %arg0, %c0_i32, %c0_i32_0 : i32, i32, i32
  }
  func.func @transform_2(%arg0: i32) -> (i32, i32) {
    %c0_i32 = arith.constant 0 : i32
    %c0_i32_0 = arith.constant 0 : i32
    %c0_i32_1 = arith.constant 0 : i32
    return %c0_i32, %c0_i32_0 : i32, i32
  }
  func.func @transform_3(%arg0: i32) -> (i32, i32) {
    %c0_i32 = arith.constant 0 : i32
    %c0_i32_0 = arith.constant 0 : i32
    %c0_i32_1 = arith.constant 0 : i32
    return %c0_i32, %c0_i32_0 : i32, i32
  }
  func.func @transform_4(%arg0: i32) -> (i32, i32) {
    %c0_i32 = arith.constant 0 : i32
    %c0_i32_0 = arith.constant 0 : i32
    %c0_i32_1 = arith.constant 0 : i32
    return %c0_i32, %c0_i32_0 : i32, i32
  }
  func.func @transform_5(%arg0: i32) -> (i32, i32) {
    %c0_i32 = arith.constant 0 : i32
    %c0_i32_0 = arith.constant 0 : i32
    %c0_i32_1 = arith.constant 0 : i32
    return %c0_i32, %c0_i32_0 : i32, i32
  }
  func.func @transform_6(%arg0: i32) -> (i32, i32) {
    %c0_i32 = arith.constant 0 : i32
    %c0_i32_0 = arith.constant 0 : i32
    %c0_i32_1 = arith.constant 0 : i32
    return %c0_i32, %c0_i32_0 : i32, i32
  }
  func.func @transform_7(%arg0: i32) -> (i32, i32) {
    %c0_i32 = arith.constant 0 : i32
    %c0_i32_0 = arith.constant 0 : i32
    %c0_i32_1 = arith.constant 0 : i32
    return %c0_i32, %c0_i32_0 : i32, i32
  }
  func.func @transform_8(%arg0: i32) -> (i32, i32) {
    %c0_i32 = arith.constant 0 : i32
    %c0_i32_0 = arith.constant 0 : i32
    %c0_i32_1 = arith.constant 0 : i32
    return %c0_i32, %c0_i32_0 : i32, i32
  }
  func.func @transform_9(%arg0: i32) -> (i32, i32) {
    %c0_i32 = arith.constant 0 : i32
    %c0_i32_0 = arith.constant 0 : i32
    %c0_i32_1 = arith.constant 0 : i32
    return %c0_i32, %c0_i32_0 : i32, i32
  }
  func.func @transform_10(%arg0: i32) -> (i32, i32) {
    %c0_i32 = arith.constant 0 : i32
    %c0_i32_0 = arith.constant 0 : i32
    %c0_i32_1 = arith.constant 0 : i32
    return %c0_i32, %c0_i32_0 : i32, i32
  }
  func.func @transform_11(%arg0: i32) -> (i32, i32) {
    %c0_i32 = arith.constant 0 : i32
    %c0_i32_0 = arith.constant 0 : i32
    %c0_i32_1 = arith.constant 0 : i32
    return %c0_i32, %c0_i32_0 : i32, i32
  }
  func.func @transform_12(%arg0: i32) -> (i32, i32) {
    %c0_i32 = arith.constant 0 : i32
    %c0_i32_0 = arith.constant 0 : i32
    %c0_i32_1 = arith.constant 0 : i32
    return %c0_i32, %c0_i32_0 : i32, i32
  }
  func.func @transform_13(%arg0: i32) -> (i32, i32) {
    %c0_i32 = arith.constant 0 : i32
    %c0_i32_0 = arith.constant 0 : i32
    %c0_i32_1 = arith.constant 0 : i32
    return %c0_i32, %c0_i32_0 : i32, i32
  }
  func.func @transform_14(%arg0: i32) -> (i32, i32) {
    %c0_i32 = arith.constant 0 : i32
    %c0_i32_0 = arith.constant 0 : i32
    %c0_i32_1 = arith.constant 0 : i32
    return %c0_i32, %c0_i32_0 : i32, i32
  }
  func.func @transform_15(%arg0: i32) -> (i32, i32) {
    %c0_i32 = arith.constant 0 : i32
    %c0_i32_0 = arith.constant 0 : i32
    %c0_i32_1 = arith.constant 0 : i32
    return %c0_i32, %c0_i32_0 : i32, i32
  }
  func.func @transform_16(%arg0: i32) -> (i32, i32) {
    %c0_i32 = arith.constant 0 : i32
    %c0_i32_0 = arith.constant 0 : i32
    %c0_i32_1 = arith.constant 0 : i32
    return %c0_i32, %c0_i32_0 : i32, i32
  }
  func.func @transform_17(%arg0: i32) -> (i32, i32) {
    %c0_i32 = arith.constant 0 : i32
    %c0_i32_0 = arith.constant 0 : i32
    %c0_i32_1 = arith.constant 0 : i32
    return %c0_i32, %c0_i32_0 : i32, i32
  }
  func.func @transform_18(%arg0: i32) -> (i32, i32, i32) {
    %c0_i32 = arith.constant 0 : i32
    %c0_i32_0 = arith.constant 0 : i32
    %c0_i32_1 = arith.constant 0 : i32
    return %arg0, %c0_i32, %c0_i32_0 : i32, i32, i32
  }
}

</mosaic_0001>

<llo_original>
// kernel: forward.1
$region0: #{forward.1}
  #allocation0 [shape = 'u32[]', space=smem, size = 0x4, offset = 0x4, fixed_abs, tag = 'smem constant byte address 0x4 - core index']
  #allocation1 [shape = 'u32[144,128]{1,0:T(1,128)}', space=vmem, size = 0x12000, scoped, tag = 'internal scratch']
  #allocation2 [shape = 'f32[12,16]{1,0:T(8,128)}', space=vmem, size = 0x2000, scoped, tag = 'scratch operand']
  #allocation3 [shape = 'f32[36,16]{1,0:T(8,128)}', space=vmem, size = 0x5000, scoped, tag = 'scratch operand']
  #allocation4 [shape = 'f32[24,16]{1,0:T(8,128)}', space=vmem, size = 0x3000, scoped, tag = 'scratch operand']
  #allocation5 [shape = 'f32[36,16]{1,0:T(8,128)}', space=vmem, size = 0x5000, scoped, tag = 'scratch operand']
  #allocation6 [shape = 'f32[24,16]{1,0:T(8,128)}', space=vmem, size = 0x3000, scoped, tag = 'scratch operand']
  #allocation7 [shape = 'f32[24,16]{1,0:T(8,128)}', space=vmem, size = 0x3000, scoped, tag = 'scratch operand']
  %s0 = inlined_call_operand.vmem [shape: f32[2,4,16], index: 0, kind: input, shape index: {}]
  %s1 = inlined_call_operand.vmem [shape: f32[2,4,1], index: 1, kind: input, shape index: {}]
  %s2 = inlined_call_operand.vmem [shape: f32[8,12], index: 2, kind: input, shape index: {}]
  %s3 = inlined_call_operand.vmem [shape: f32[8,1], index: 3, kind: input, shape index: {}]
  %s4 = inlined_call_operand.vmem [shape: f32[8,36], index: 4, kind: input, shape index: {}]
  %s5 = inlined_call_operand.vmem [shape: f32[8,1], index: 5, kind: input, shape index: {}]
  %s6 = inlined_call_operand.vmem [shape: f32[8,4], index: 6, kind: input, shape index: {}]
  %s7 = inlined_call_operand.vmem [shape: f32[8,1], index: 7, kind: input, shape index: {}]
  %s8 = inlined_call_operand.vmem [shape: f32[8,24], index: 8, kind: input, shape index: {}]
  %s9 = inlined_call_operand.vmem [shape: f32[8,1], index: 9, kind: input, shape index: {}]
  %s10 = inlined_call_operand.vmem [shape: f32[8,36], index: 10, kind: input, shape index: {}]
  %s11 = inlined_call_operand.vmem [shape: f32[8,1], index: 11, kind: input, shape index: {}]
  %s12 = inlined_call_operand.vmem [shape: f32[4,24], index: 12, kind: input, shape index: {}]
  %s13 = inlined_call_operand.vmem [shape: f32[4,1], index: 13, kind: input, shape index: {}]
  %s14 = inlined_call_operand.vmem [shape: f32[4,24], index: 14, kind: input, shape index: {}]
  %s15 = inlined_call_operand.vmem [shape: f32[4,1], index: 15, kind: input, shape index: {}]
  %s16 = inlined_call_operand.vmem [shape: f32[4,8], index: 16, kind: input, shape index: {}]
  %s17 = inlined_call_operand.vmem [shape: f32[4,1], index: 17, kind: input, shape index: {}]
  %s18 = inlined_call_operand.hbm [shape: f32[2,4,16], index: 18, kind: output, shape index: {}]
  %s19 = sld [smem:[#allocation0]]
  $region105: #{forward.1} parent=0
    _
  %s21 = ssub.s32 1, %s19
  %s22 = scalar_select 0, %s21, %s19
  $region1: #{forward.1} parent=0
    #allocation8 [shape = 'u8[4096]{0}', space=vmem, size = 0x1000, scoped, tag = 'output window, operand 0']
    #allocation9 [shape = 's32[2]{0}', space=sflag, size = 0x8, scoped, tag = 'scoped memory for forward.1']
    %23 = vsyncpa [#allocation9], 0
    %s24 = scalar_lea.sflag [#allocation9], 1
    %25 = vsyncpa %s24, 0
    loop: start=0, step=1, limit=4
    $region2: #{forward.1} parent=1 // loop_pre_header
      _
    $region3: #{forward.1} parent=1 // loop_header
      %s27 = sphi 0, %s31
      %p28 = scmp.ge.s32.totalorder %s27, 4
      %s37 = sphi 0, %s39
      %s40 = sphi 0, %s37
      %s41 = sphi 0, %s40
      %s57 = sphi 0, %s41
      %s63 = sphi 0, %s65
      %s66 = sphi 0, %s63
      %s67 = sphi 0, %s66
      %s83 = sphi 0, %s67
      %s87 = sphi 0, %s87
      %s89 = sphi 0, %s87
      %s90 = sphi 0, %s89
      %s104 = sphi 0, %s90
      %s108 = sphi 0, %s108
      %s110 = sphi 0, %s108
      %s111 = sphi 0, %s110
      %s125 = sphi 0, %s111
      %s129 = sphi 0, %s129
      %s131 = sphi 0, %s129
      %s132 = sphi 0, %s131
      %s146 = sphi 0, %s132
      %s150 = sphi 0, %s150
      %s152 = sphi 0, %s150
      %s153 = sphi 0, %s152
      %s167 = sphi 0, %s153
      %s171 = sphi 0, %s171
      %s173 = sphi 0, %s171
      %s174 = sphi 0, %s173
      %s188 = sphi 0, %s174
      %s192 = sphi 0, %s192
      %s194 = sphi 0, %s192
      %s195 = sphi 0, %s194
      %s209 = sphi 0, %s195
      %s213 = sphi 0, %s213
      %s215 = sphi 0, %s213
      %s216 = sphi 0, %s215
      %s230 = sphi 0, %s216
      %s234 = sphi 0, %s234
      %s236 = sphi 0, %s234
      %s237 = sphi 0, %s236
      %s251 = sphi 0, %s237
      %s255 = sphi 0, %s255
      %s257 = sphi 0, %s255
      %s258 = sphi 0, %s257
      %s272 = sphi 0, %s258
      %s276 = sphi 0, %s276
      %s278 = sphi 0, %s276
      %s279 = sphi 0, %s278
      %s293 = sphi 0, %s279
      %s297 = sphi 0, %s297
      %s299 = sphi 0, %s297
      %s300 = sphi 0, %s299
      %s314 = sphi 0, %s300
      %s318 = sphi 0, %s318
      %s320 = sphi 0, %s318
      %s321 = sphi 0, %s320
      %s335 = sphi 0, %s321
      %s339 = sphi 0, %s339
      %s341 = sphi 0, %s339
      %s342 = sphi 0, %s341
      %s356 = sphi 0, %s342
      %s360 = sphi 0, %s360
      %s362 = sphi 0, %s360
      %s363 = sphi 0, %s362
      %s377 = sphi 0, %s363
      %s381 = sphi 0, %s381
      %s383 = sphi 0, %s381
      %s384 = sphi 0, %s383
      %s398 = sphi 0, %s384
      %s402 = sphi 0, %s402
      %s404 = sphi 0, %s402
      %s405 = sphi 0, %s404
      %s419 = sphi 0, %s405
      %s425 = sphi 0, %s427
      %s428 = sphi 0, %s425
      %s429 = sphi 0, %s428
      %s445 = sphi 0, %s429
    $region4: #{forward.1} parent=1 // loop_header_branch
      %30 = sbr.rel (%p28) target = $region8
    $region5: #{forward.1} parent=1 // loop_body
      %s32 = ssub.s32 %s27, 1
      %s33 = ssub.s32 %s27, 2
      %s34 = sadd.s32 %s27, 1
      %s35 = ssub.s32 %s27, %s34
      %p36 = scmp.eq.s32.totalorder %s35, 0
      %s38 = sadd.s32 %s37, 1
      %s39 = scalar_select %p36, %s37, %s38
      %p42 = pneg %p36
      %p43 = scmp.eq.s32.totalorder %s27, 1
      %p44 = por %p42, %p43
      %p45 = scmp.ne.s32.totalorder %s37, %s40
      %p46 = scmp.eq.s32.totalorder %s27, 0
      %p47 = por %p45, %p46
      %p48 = scmp.ne.s32.totalorder %s37, %s40
      %p49 = scmp.eq.s32.totalorder %s32, 1
      %p50 = por %p48, %p49
      %p51 = scmp.ne.s32.totalorder %s40, %s41
      %p52 = scmp.eq.s32.totalorder %s32, 0
      %p53 = por %p51, %p52
      %p54 = scmp.ne.s32.totalorder %s40, %s41
      %p55 = scmp.eq.s32.totalorder %s33, 1
      %p56 = por %p54, %p55
      %p58 = scmp.ne.s32.totalorder %s41, %s57
      %p59 = scmp.eq.s32.totalorder %s33, 0
      %p60 = por %p58, %p59
      %s61 = ssub.s32 %s27, %s34
      %p62 = scmp.eq.s32.totalorder %s61, 0
      %s64 = sadd.s32 %s63, 1
      %s65 = scalar_select %p62, %s63, %s64
      %p68 = pneg %p62
      %p69 = scmp.eq.s32.totalorder %s27, 1
      %p70 = por %p68, %p69
      %p71 = scmp.ne.s32.totalorder %s63, %s66
      %p72 = scmp.eq.s32.totalorder %s27, 0
      %p73 = por %p71, %p72
      %p74 = scmp.ne.s32.totalorder %s63, %s66
      %p75 = scmp.eq.s32.totalorder %s32, 1
      %p76 = por %p74, %p75
      %p77 = scmp.ne.s32.totalorder %s66, %s67
      %p78 = scmp.eq.s32.totalorder %s32, 0
      %p79 = por %p77, %p78
      %p80 = scmp.ne.s32.totalorder %s66, %s67
      %p81 = scmp.eq.s32.totalorder %s33, 1
      %p82 = por %p80, %p81
      %p84 = scmp.ne.s32.totalorder %s67, %s83
      %p85 = scmp.eq.s32.totalorder %s33, 0
      %p86 = por %p84, %p85
      %s88 = sadd.s32 %s87, 1
      %p91 = scmp.eq.s32.totalorder %s27, 1
      %p92 = scmp.ne.s32.totalorder %s87, %s89
      %p93 = scmp.eq.s32.totalorder %s27, 0
      %p94 = por %p92, %p93
      %p95 = scmp.ne.s32.totalorder %s87, %s89
      %p96 = scmp.eq.s32.totalorder %s32, 1
      %p97 = por %p95, %p96
      %p98 = scmp.ne.s32.totalorder %s89, %s90
      %p99 = scmp.eq.s32.totalorder %s32, 0
      %p100 = por %p98, %p99
      %p101 = scmp.ne.s32.totalorder %s89, %s90
      %p102 = scmp.eq.s32.totalorder %s33, 1
      %p103 = por %p101, %p102
      %p105 = scmp.ne.s32.totalorder %s90, %s104
      %p106 = scmp.eq.s32.totalorder %s33, 0
      %p107 = por %p105, %p106
      %s109 = sadd.s32 %s108, 1
      %p112 = scmp.eq.s32.totalorder %s27, 1
      %p113 = scmp.ne.s32.totalorder %s108, %s110
      %p114 = scmp.eq.s32.totalorder %s27, 0
      %p115 = por %p113, %p114
      %p116 = scmp.ne.s32.totalorder %s108, %s110
      %p117 = scmp.eq.s32.totalorder %s32, 1
      %p118 = por %p116, %p117
      %p119 = scmp.ne.s32.totalorder %s110, %s111
      %p120 = scmp.eq.s32.totalorder %s32, 0
      %p121 = por %p119, %p120
      %p122 = scmp.ne.s32.totalorder %s110, %s111
      %p123 = scmp.eq.s32.totalorder %s33, 1
      %p124 = por %p122, %p123
      %p126 = scmp.ne.s32.totalorder %s111, %s125
      %p127 = scmp.eq.s32.totalorder %s33, 0
      %p128 = por %p126, %p127
      %s130 = sadd.s32 %s129, 1
      %p133 = scmp.eq.s32.totalorder %s27, 1
      %p134 = scmp.ne.s32.totalorder %s129, %s131
      %p135 = scmp.eq.s32.totalorder %s27, 0
      %p136 = por %p134, %p135
      %p137 = scmp.ne.s32.totalorder %s129, %s131
      %p138 = scmp.eq.s32.totalorder %s32, 1
      %p139 = por %p137, %p138
      %p140 = scmp.ne.s32.totalorder %s131, %s132
      %p141 = scmp.eq.s32.totalorder %s32, 0
      %p142 = por %p140, %p141
      %p143 = scmp.ne.s32.totalorder %s131, %s132
      %p144 = scmp.eq.s32.totalorder %s33, 1
      %p145 = por %p143, %p144
      %p147 = scmp.ne.s32.totalorder %s132, %s146
      %p148 = scmp.eq.s32.totalorder %s33, 0
      %p149 = por %p147, %p148
      %s151 = sadd.s32 %s150, 1
      %p154 = scmp.eq.s32.totalorder %s27, 1
      %p155 = scmp.ne.s32.totalorder %s150, %s152
      %p156 = scmp.eq.s32.totalorder %s27, 0
      %p157 = por %p155, %p156
      %p158 = scmp.ne.s32.totalorder %s150, %s152
      %p159 = scmp.eq.s32.totalorder %s32, 1
      %p160 = por %p158, %p159
      %p161 = scmp.ne.s32.totalorder %s152, %s153
      %p162 = scmp.eq.s32.totalorder %s32, 0
      %p163 = por %p161, %p162
      %p164 = scmp.ne.s32.totalorder %s152, %s153
      %p165 = scmp.eq.s32.totalorder %s33, 1
      %p166 = por %p164, %p165
      %p168 = scmp.ne.s32.totalorder %s153, %s167
      %p169 = scmp.eq.s32.totalorder %s33, 0
      %p170 = por %p168, %p169
      %s172 = sadd.s32 %s171, 1
      %p175 = scmp.eq.s32.totalorder %s27, 1
      %p176 = scmp.ne.s32.totalorder %s171, %s173
      %p177 = scmp.eq.s32.totalorder %s27, 0
      %p178 = por %p176, %p177
      %p179 = scmp.ne.s32.totalorder %s171, %s173
      %p180 = scmp.eq.s32.totalorder %s32, 1
      %p181 = por %p179, %p180
      %p182 = scmp.ne.s32.totalorder %s173, %s174
      %p183 = scmp.eq.s32.totalorder %s32, 0
      %p184 = por %p182, %p183
      %p185 = scmp.ne.s32.totalorder %s173, %s174
      %p186 = scmp.eq.s32.totalorder %s33, 1
      %p187 = por %p185, %p186
      %p189 = scmp.ne.s32.totalorder %s174, %s188
      %p190 = scmp.eq.s32.totalorder %s33, 0
      %p191 = por %p189, %p190
      %s193 = sadd.s32 %s192, 1
      %p196 = scmp.eq.s32.totalorder %s27, 1
      %p197 = scmp.ne.s32.totalorder %s192, %s194
      %p198 = scmp.eq.s32.totalorder %s27, 0
      %p199 = por %p197, %p198
      %p200 = scmp.ne.s32.totalorder %s192, %s194
      %p201 = scmp.eq.s32.totalorder %s32, 1
      %p202 = por %p200, %p201
      %p203 = scmp.ne.s32.totalorder %s194, %s195
      %p204 = scmp.eq.s32.totalorder %s32, 0
      %p205 = por %p203, %p204
      %p206 = scmp.ne.s32.totalorder %s194, %s195
      %p207 = scmp.eq.s32.totalorder %s33, 1
      %p208 = por %p206, %p207
      %p210 = scmp.ne.s32.totalorder %s195, %s209
      %p211 = scmp.eq.s32.totalorder %s33, 0
      %p212 = por %p210, %p211
      %s214 = sadd.s32 %s213, 1
      %p217 = scmp.eq.s32.totalorder %s27, 1
      %p218 = scmp.ne.s32.totalorder %s213, %s215
      %p219 = scmp.eq.s32.totalorder %s27, 0
      %p220 = por %p218, %p219
      %p221 = scmp.ne.s32.totalorder %s213, %s215
      %p222 = scmp.eq.s32.totalorder %s32, 1
      %p223 = por %p221, %p222
      %p224 = scmp.ne.s32.totalorder %s215, %s216
      %p225 = scmp.eq.s32.totalorder %s32, 0
      %p226 = por %p224, %p225
      %p227 = scmp.ne.s32.totalorder %s215, %s216
      %p228 = scmp.eq.s32.totalorder %s33, 1
      %p229 = por %p227, %p228
      %p231 = scmp.ne.s32.totalorder %s216, %s230
      %p232 = scmp.eq.s32.totalorder %s33, 0
      %p233 = por %p231, %p232
      %s235 = sadd.s32 %s234, 1
      %p238 = scmp.eq.s32.totalorder %s27, 1
      %p239 = scmp.ne.s32.totalorder %s234, %s236
      %p240 = scmp.eq.s32.totalorder %s27, 0
      %p241 = por %p239, %p240
      %p242 = scmp.ne.s32.totalorder %s234, %s236
      %p243 = scmp.eq.s32.totalorder %s32, 1
      %p244 = por %p242, %p243
      %p245 = scmp.ne.s32.totalorder %s236, %s237
      %p246 = scmp.eq.s32.totalorder %s32, 0
      %p247 = por %p245, %p246
      %p248 = scmp.ne.s32.totalorder %s236, %s237
      %p249 = scmp.eq.s32.totalorder %s33, 1
      %p250 = por %p248, %p249
      %p252 = scmp.ne.s32.totalorder %s237, %s251
      %p253 = scmp.eq.s32.totalorder %s33, 0
      %p254 = por %p252, %p253
      %s256 = sadd.s32 %s255, 1
      %p259 = scmp.eq.s32.totalorder %s27, 1
      %p260 = scmp.ne.s32.totalorder %s255, %s257
      %p261 = scmp.eq.s32.totalorder %s27, 0
      %p262 = por %p260, %p261
      %p263 = scmp.ne.s32.totalorder %s255, %s257
      %p264 = scmp.eq.s32.totalorder %s32, 1
      %p265 = por %p263, %p264
      %p266 = scmp.ne.s32.totalorder %s257, %s258
      %p267 = scmp.eq.s32.totalorder %s32, 0
      %p268 = por %p266, %p267
      %p269 = scmp.ne.s32.totalorder %s257, %s258
      %p270 = scmp.eq.s32.totalorder %s33, 1
      %p271 = por %p269, %p270
      %p273 = scmp.ne.s32.totalorder %s258, %s272
      %p274 = scmp.eq.s32.totalorder %s33, 0
      %p275 = por %p273, %p274
      %s277 = sadd.s32 %s276, 1
      %p280 = scmp.eq.s32.totalorder %s27, 1
      %p281 = scmp.ne.s32.totalorder %s276, %s278
      %p282 = scmp.eq.s32.totalorder %s27, 0
      %p283 = por %p281, %p282
      %p284 = scmp.ne.s32.totalorder %s276, %s278
      %p285 = scmp.eq.s32.totalorder %s32, 1
      %p286 = por %p284, %p285
      %p287 = scmp.ne.s32.totalorder %s278, %s279
      %p288 = scmp.eq.s32.totalorder %s32, 0
      %p289 = por %p287, %p288
      %p290 = scmp.ne.s32.totalorder %s278, %s279
      %p291 = scmp.eq.s32.totalorder %s33, 1
      %p292 = por %p290, %p291
      %p294 = scmp.ne.s32.totalorder %s279, %s293
      %p295 = scmp.eq.s32.totalorder %s33, 0
      %p296 = por %p294, %p295
      %s298 = sadd.s32 %s297, 1
      %p301 = scmp.eq.s32.totalorder %s27, 1
      %p302 = scmp.ne.s32.totalorder %s297, %s299
      %p303 = scmp.eq.s32.totalorder %s27, 0
      %p304 = por %p302, %p303
      %p305 = scmp.ne.s32.totalorder %s297, %s299
      %p306 = scmp.eq.s32.totalorder %s32, 1
      %p307 = por %p305, %p306
      %p308 = scmp.ne.s32.totalorder %s299, %s300
      %p309 = scmp.eq.s32.totalorder %s32, 0
      %p310 = por %p308, %p309
      %p311 = scmp.ne.s32.totalorder %s299, %s300
      %p312 = scmp.eq.s32.totalorder %s33, 1
      %p313 = por %p311, %p312
      %p315 = scmp.ne.s32.totalorder %s300, %s314
      %p316 = scmp.eq.s32.totalorder %s33, 0
      %p317 = por %p315, %p316
      %s319 = sadd.s32 %s318, 1
      %p322 = scmp.eq.s32.totalorder %s27, 1
      %p323 = scmp.ne.s32.totalorder %s318, %s320
      %p324 = scmp.eq.s32.totalorder %s27, 0
      %p325 = por %p323, %p324
      %p326 = scmp.ne.s32.totalorder %s318, %s320
      %p327 = scmp.eq.s32.totalorder %s32, 1
      %p328 = por %p326, %p327
      %p329 = scmp.ne.s32.totalorder %s320, %s321
      %p330 = scmp.eq.s32.totalorder %s32, 0
      %p331 = por %p329, %p330
      %p332 = scmp.ne.s32.totalorder %s320, %s321
      %p333 = scmp.eq.s32.totalorder %s33, 1
      %p334 = por %p332, %p333
      %p336 = scmp.ne.s32.totalorder %s321, %s335
      %p337 = scmp.eq.s32.totalorder %s33, 0
      %p338 = por %p336, %p337
      %s340 = sadd.s32 %s339, 1
      %p343 = scmp.eq.s32.totalorder %s27, 1
      %p344 = scmp.ne.s32.totalorder %s339, %s341
      %p345 = scmp.eq.s32.totalorder %s27, 0
      %p346 = por %p344, %p345
      %p347 = scmp.ne.s32.totalorder %s339, %s341
      %p348 = scmp.eq.s32.totalorder %s32, 1
      %p349 = por %p347, %p348
      %p350 = scmp.ne.s32.totalorder %s341, %s342
      %p351 = scmp.eq.s32.totalorder %s32, 0
      %p352 = por %p350, %p351
      %p353 = scmp.ne.s32.totalorder %s341, %s342
      %p354 = scmp.eq.s32.totalorder %s33, 1
      %p355 = por %p353, %p354
      %p357 = scmp.ne.s32.totalorder %s342, %s356
      %p358 = scmp.eq.s32.totalorder %s33, 0
      %p359 = por %p357, %p358
      %s361 = sadd.s32 %s360, 1
      %p364 = scmp.eq.s32.totalorder %s27, 1
      %p365 = scmp.ne.s32.totalorder %s360, %s362
      %p366 = scmp.eq.s32.totalorder %s27, 0
      %p367 = por %p365, %p366
      %p368 = scmp.ne.s32.totalorder %s360, %s362
      %p369 = scmp.eq.s32.totalorder %s32, 1
      %p370 = por %p368, %p369
      %p371 = scmp.ne.s32.totalorder %s362, %s363
      %p372 = scmp.eq.s32.totalorder %s32, 0
      %p373 = por %p371, %p372
      %p374 = scmp.ne.s32.totalorder %s362, %s363
      %p375 = scmp.eq.s32.totalorder %s33, 1
      %p376 = por %p374, %p375
      %p378 = scmp.ne.s32.totalorder %s363, %s377
      %p379 = scmp.eq.s32.totalorder %s33, 0
      %p380 = por %p378, %p379
      %s382 = sadd.s32 %s381, 1
      %p385 = scmp.eq.s32.totalorder %s27, 1
      %p386 = scmp.ne.s32.totalorder %s381, %s383
      %p387 = scmp.eq.s32.totalorder %s27, 0
      %p388 = por %p386, %p387
      %p389 = scmp.ne.s32.totalorder %s381, %s383
      %p390 = scmp.eq.s32.totalorder %s32, 1
      %p391 = por %p389, %p390
      %p392 = scmp.ne.s32.totalorder %s383, %s384
      %p393 = scmp.eq.s32.totalorder %s32, 0
      %p394 = por %p392, %p393
      %p395 = scmp.ne.s32.totalorder %s383, %s384
      %p396 = scmp.eq.s32.totalorder %s33, 1
      %p397 = por %p395, %p396
      %p399 = scmp.ne.s32.totalorder %s384, %s398
      %p400 = scmp.eq.s32.totalorder %s33, 0
      %p401 = por %p399, %p400
      %s403 = sadd.s32 %s402, 1
      %p406 = scmp.eq.s32.totalorder %s27, 1
      %p407 = scmp.ne.s32.totalorder %s402, %s404
      %p408 = scmp.eq.s32.totalorder %s27, 0
      %p409 = por %p407, %p408
      %p410 = scmp.ne.s32.totalorder %s402, %s404
      %p411 = scmp.eq.s32.totalorder %s32, 1
      %p412 = por %p410, %p411
      %p413 = scmp.ne.s32.totalorder %s404, %s405
      %p414 = scmp.eq.s32.totalorder %s32, 0
      %p415 = por %p413, %p414
      %p416 = scmp.ne.s32.totalorder %s404, %s405
      %p417 = scmp.eq.s32.totalorder %s33, 1
      %p418 = por %p416, %p417
      %p420 = scmp.ne.s32.totalorder %s405, %s419
      %p421 = scmp.eq.s32.totalorder %s33, 0
      %p422 = por %p420, %p421
      %s423 = ssub.s32 %s27, %s34
      %p424 = scmp.eq.s32.totalorder %s423, 0
      %s426 = sadd.s32 %s425, 1
      %s427 = scalar_select %p424, %s425, %s426
      %p430 = pneg %p424
      %p431 = scmp.eq.s32.totalorder %s27, 1
      %p432 = por %p430, %p431
      %p433 = scmp.ne.s32.totalorder %s425, %s428
      %p434 = scmp.eq.s32.totalorder %s27, 0
      %p435 = por %p433, %p434
      %p436 = scmp.ne.s32.totalorder %s425, %s428
      %p437 = scmp.eq.s32.totalorder %s32, 1
      %p438 = por %p436, %p437
      %p439 = scmp.ne.s32.totalorder %s428, %s429
      %p440 = scmp.eq.s32.totalorder %s32, 0
      %p441 = por %p439, %p440
      %p442 = scmp.ne.s32.totalorder %s428, %s429
      %p443 = scmp.eq.s32.totalorder %s33, 1
      %p444 = por %p442, %p443
      %p446 = scmp.ne.s32.totalorder %s429, %s445
      %p447 = scmp.eq.s32.totalorder %s33, 0
      %p448 = por %p446, %p447
      %p449 = scmp.le.s32.totalorder 1, %s27
      %p450 = scmp.lt.s32.totalorder %s27, 3
      %p451 = pnand %p449, %p450
      %p452 = pneg %p451
      // Predicated region
      $region9: #{forward.1} parent=5 // pred_check
        _
      $region10: #{forward.1} parent=5 // pred_check_branch
        %454 = sbr.rel (%p451) target = $region12
      $region11: #{forward.1} parent=5 // pred_region
        %s455 = ssub.s32 %s27, 1
        // Predicated region
        $region13: #{forward.1} parent=11 // pred_check
          %p456 = pneg %p100
        $region14: #{forward.1} parent=11 // pred_check_branch
          %458 = sbr.rel (%p456) target = $region16
        $region15: #{forward.1} parent=11 // pred_region
          _
        $region16: #{forward.1} parent=11 // pred_fallthru
          _
        // Predicated region
        $region17: #{forward.1} parent=11 // pred_check
          %p459 = pneg %p121
        $region18: #{forward.1} parent=11 // pred_check_branch
          %461 = sbr.rel (%p459) target = $region20
        $region19: #{forward.1} parent=11 // pred_region
          _
        $region20: #{forward.1} parent=11 // pred_fallthru
          _
        // Predicated region
        $region21: #{forward.1} parent=11 // pred_check
          %p462 = pneg %p142
        $region22: #{forward.1} parent=11 // pred_check_branch
          %464 = sbr.rel (%p462) target = $region24
        $region23: #{forward.1} parent=11 // pred_region
          _
        $region24: #{forward.1} parent=11 // pred_fallthru
          _
        // Predicated region
        $region25: #{forward.1} parent=11 // pred_check
          %p465 = pneg %p163
        $region26: #{forward.1} parent=11 // pred_check_branch
          %467 = sbr.rel (%p465) target = $region28
        $region27: #{forward.1} parent=11 // pred_region
          _
        $region28: #{forward.1} parent=11 // pred_fallthru
          _
        // Predicated region
        $region29: #{forward.1} parent=11 // pred_check
          %p468 = pneg %p184
        $region30: #{forward.1} parent=11 // pred_check_branch
          %470 = sbr.rel (%p468) target = $region32
        $region31: #{forward.1} parent=11 // pred_region
          _
        $region32: #{forward.1} parent=11 // pred_fallthru
          _
        // Predicated region
        $region33: #{forward.1} parent=11 // pred_check
          %p471 = pneg %p205
        $region34: #{forward.1} parent=11 // pred_check_branch
          %473 = sbr.rel (%p471) target = $region36
        $region35: #{forward.1} parent=11 // pred_region
          _
        $region36: #{forward.1} parent=11 // pred_fallthru
          _
        // Predicated region
        $region37: #{forward.1} parent=11 // pred_check
          %p474 = pneg %p226
        $region38: #{forward.1} parent=11 // pred_check_branch
          %476 = sbr.rel (%p474) target = $region40
        $region39: #{forward.1} parent=11 // pred_region
          _
        $region40: #{forward.1} parent=11 // pred_fallthru
          _
        // Predicated region
        $region41: #{forward.1} parent=11 // pred_check
          %p477 = pneg %p247
        $region42: #{forward.1} parent=11 // pred_check_branch
          %479 = sbr.rel (%p477) target = $region44
        $region43: #{forward.1} parent=11 // pred_region
          _
        $region44: #{forward.1} parent=11 // pred_fallthru
          _
        // Predicated region
        $region45: #{forward.1} parent=11 // pred_check
          %p480 = pneg %p268
        $region46: #{forward.1} parent=11 // pred_check_branch
          %482 = sbr.rel (%p480) target = $region48
        $region47: #{forward.1} parent=11 // pred_region
          _
        $region48: #{forward.1} parent=11 // pred_fallthru
          _
        // Predicated region
        $region49: #{forward.1} parent=11 // pred_check
          %p483 = pneg %p289
        $region50: #{forward.1} parent=11 // pred_check_branch
          %485 = sbr.rel (%p483) target = $region52
        $region51: #{forward.1} parent=11 // pred_region
          _
        $region52: #{forward.1} parent=11 // pred_fallthru
          _
        // Predicated region
        $region53: #{forward.1} parent=11 // pred_check
          %p486 = pneg %p310
        $region54: #{forward.1} parent=11 // pred_check_branch
          %488 = sbr.rel (%p486) target = $region56
        $region55: #{forward.1} parent=11 // pred_region
          _
        $region56: #{forward.1} parent=11 // pred_fallthru
          _
        // Predicated region
        $region57: #{forward.1} parent=11 // pred_check
          %p489 = pneg %p331
        $region58: #{forward.1} parent=11 // pred_check_branch
          %491 = sbr.rel (%p489) target = $region60
        $region59: #{forward.1} parent=11 // pred_region
          _
        $region60: #{forward.1} parent=11 // pred_fallthru
          _
        // Predicated region
        $region61: #{forward.1} parent=11 // pred_check
          %p492 = pneg %p352
        $region62: #{forward.1} parent=11 // pred_check_branch
          %494 = sbr.rel (%p492) target = $region64
        $region63: #{forward.1} parent=11 // pred_region
          _
        $region64: #{forward.1} parent=11 // pred_fallthru
          _
        // Predicated region
        $region65: #{forward.1} parent=11 // pred_check
          %p495 = pneg %p373
        $region66: #{forward.1} parent=11 // pred_check_branch
          %497 = sbr.rel (%p495) target = $region68
        $region67: #{forward.1} parent=11 // pred_region
          _
        $region68: #{forward.1} parent=11 // pred_fallthru
          _
        // Predicated region
        $region69: #{forward.1} parent=11 // pred_check
          %p498 = pneg %p394
        $region70: #{forward.1} parent=11 // pred_check_branch
          %500 = sbr.rel (%p498) target = $region72
        $region71: #{forward.1} parent=11 // pred_region
          _
        $region72: #{forward.1} parent=11 // pred_fallthru
          _
        // Predicated region
        $region73: #{forward.1} parent=11 // pred_check
          %p501 = pneg %p415
        $region74: #{forward.1} parent=11 // pred_check_branch
          %503 = sbr.rel (%p501) target = $region76
        $region75: #{forward.1} parent=11 // pred_region
          _
        $region76: #{forward.1} parent=11 // pred_fallthru
          _
      $region12: #{forward.1} parent=5 // pred_fallthru
        _
      %p504 = scmp.lt.s32.totalorder %s27, 2
      // Predicated region
      $region77: #{forward.1} parent=5 // pred_check
        %p505 = pneg %p504
      $region78: #{forward.1} parent=5 // pred_check_branch
        %507 = sbr.rel (%p505) target = $region80
      $region79: #{forward.1} parent=5 // pred_region
        // Predicated region
        $region81: #{forward.1} parent=79 // pred_check
          %p508 = pneg %p47
        $region82: #{forward.1} parent=79 // pred_check_branch
          %510 = sbr.rel (%p508) target = $region84
        $region83: #{forward.1} parent=79 // pred_region
          %p511 = scmp.lt.s32.totalorder %s27, 1
          %s512 = scalar_select %p511, %s27, 1
          %s513 = smul.addr %s512, 4
          %s514 = scalar_lea.vmem %s0, %s513
        $region84: #{forward.1} parent=79 // pred_fallthru
          _
        // Predicated region
        $region85: #{forward.1} parent=79 // pred_check
          %p515 = pneg %p73
        $region86: #{forward.1} parent=79 // pred_check_branch
          %517 = sbr.rel (%p515) target = $region88
        $region87: #{forward.1} parent=79 // pred_region
          %p518 = scmp.lt.s32.totalorder %s27, 1
          %s519 = scalar_select %p518, %s27, 1
          %s520 = smul.addr %s519, 4
          %s521 = scalar_lea.vmem %s1, %s520
        $region88: #{forward.1} parent=79 // pred_fallthru
          _
      $region80: #{forward.1} parent=5 // pred_fallthru
        _
      %p522 = scmp.le.s32.totalorder 1, %s27
      %p523 = scmp.lt.s32.totalorder %s27, 3
      %p524 = pnand %p522, %p523
      %p525 = pneg %p524
      // Predicated region
      $region89: #{forward.1} parent=5 // pred_check
        _
      $region90: #{forward.1} parent=5 // pred_check_branch
        %527 = sbr.rel (%p524) target = $region92
      $region91: #{forward.1} parent=5 // pred_region
        %s528 = ssub.s32 %s27, 1
        %p529 = scmp.lt.s32.totalorder %s32, 1
        %s530 = scalar_select %p529, %s32, 1
        %s531 = smul.addr %s530, 4
        %s532 = scalar_lea.vmem %s0, %s531
        %p533 = pneg %p53
        %p534 = pneg %p50
        %p535 = scmp.lt.s32.totalorder %s32, 1
        %s536 = scalar_select %p535, %s32, 1
        %s537 = smul.addr %s536, 4
        %s538 = scalar_lea.vmem %s1, %s537
        %p539 = pneg %p79
        %p540 = pneg %p76
        %p541 = pneg %p100
        %p542 = pneg %p97
        %p543 = pneg %p121
        %p544 = pneg %p118
        %p545 = pneg %p142
        %p546 = pneg %p139
        %p547 = pneg %p163
        %p548 = pneg %p160
        %p549 = pneg %p184
        %p550 = pneg %p181
        %p551 = pneg %p205
        %p552 = pneg %p202
        %p553 = pneg %p226
        %p554 = pneg %p223
        %p555 = pneg %p247
        %p556 = pneg %p244
        %p557 = pneg %p268
        %p558 = pneg %p265
        %p559 = pneg %p289
        %p560 = pneg %p286
        %p561 = pneg %p310
        %p562 = pneg %p307
        %p563 = pneg %p331
        %p564 = pneg %p328
        %p565 = pneg %p352
        %p566 = pneg %p349
        %p567 = pneg %p373
        %p568 = pneg %p370
        %p569 = pneg %p394
        %p570 = pneg %p391
        %p571 = pneg %p415
        %p572 = pneg %p412
        %p573 = pneg %p441
        %p574 = pneg %p438
        %s575 = sand.u32 %s428, 1
        %s576 = scalar_lea.sflag [#allocation9], %s575
        %s577 = sand.u32 %s428, 1
        %s578 = smul.addr %s577, 4
        %s579 = scalar_lea.vmem [#allocation8], %s578
        %p580 = scmp.lt.s32.totalorder %s32, 1
        %s581 = scalar_select %p580, %s32, 1
        %s582 = smul.addr %s581, 4
        %s583 = scalar_lea.vmem %s0, %s582
        %p584 = scmp.lt.s32.totalorder %s32, 1
        %s585 = scalar_select %p584, %s32, 1
        %s586 = smul.addr %s585, 4
        %s587 = scalar_lea.vmem %s1, %s586
        %v588 = vld [vmem:[%s583] sm:$0xf]
        %v589 = vld [vmem:[%s587] sm:$0xf]
        %591 = vset.pattern.permute.xlu0 0
        %592 = vperm.xlu0 %591, %v589
        %v593 = vpop.permute.xlu0 %592
        %vm595 = vcmask 130048
        %596 = vst.msk [vmem:[#allocation2] sm:$0xff] %vm595, 0.0
        %vm597 = vcmask 125952
        %598 = vst.msk [vmem:[#allocation2 + $0x8] sm:$0xf] %vm597, 0.0
        %600 = vrot.lane.b32.xlu0 %v588, 1
        %v601 = vpop.permute.xlu0 %600
        %vm603 = vcmask 125960
        %604 = vst.msk [vmem:[#allocation2] sm:$0xf] %vm603, %v601
        %605 = vst.msk [vmem:[#allocation2 + $0x4] sm:$0xf] %vm597, %v588
        %606 = vrot.lane.b32.xlu0 %v588, 127
        %v607 = vpop.permute.xlu0 %606
        %vm609 = vcmask 117760
        %610 = vst.msk [vmem:[#allocation2 + $0x8] sm:$0xf] %vm609, %v607
        %v611 = vld [vmem:[%s2] sm:$0xff]
        %v612 = vld [vmem:[#allocation2] sm:$0xff]
        %v613 = vld [vmem:[#allocation2 + $0x8] sm:$0xf]
        %v614 = vld [vmem:[%s3] sm:$0xff]
        %616 = vset.pattern.permute.xlu0 0
        %617 = vperm.xlu0 %616, %v614
        %v618 = vpop.permute.xlu0 %617
        %vm620 = vcmask 97280
        %v622 = vsel %vm620, %v611, 0
        %vm624 = vcmask 1043456
        %v626 = vsel %vm624, %v613, 0
        %628 = vmatprep.subr.mxu0 0.0
        %629 = vmatpush1.msra.mxu0 %v612
        %630 = vmatprep.subr.mxu0 0.0
        %631 = vmatpush1.msra.mxu0 %v626
        %632 = vmatprep.subr.mxu0 0.0
        %633 = vmatpush1.msra.mxu0 0.0
        %634 = vmatprep.subr.mxu0 0.0
        %635 = vmatpush1.msra.mxu0 0.0
        %636 = vmatprep.subr.mxu0 0.0
        %637 = vmatpush1.msra.mxu0 0.0
        %638 = vmatprep.subr.mxu0 0.0
        %639 = vmatpush1.msra.mxu0 0.0
        %640 = vmatprep.subr.mxu0 0.0
        %641 = vmatpush1.msra.mxu0 0.0
        %642 = vmatprep.subr.mxu0 0.0
        %643 = vmatpush1.msra.mxu0 0.0
        %644 = vmatprep.subr.mxu0 0.0
        %645 = vmatpush1.msra.mxu0 0.0
        %646 = vmatprep.subr.mxu0 0.0
        %647 = vmatpush1.msra.mxu0 0.0
        %648 = vmatprep.subr.mxu0 0.0
        %649 = vmatpush1.msra.mxu0 0.0
        %650 = vmatprep.subr.mxu0 0.0
        %651 = vmatpush1.msra.mxu0 0.0
        %652 = vmatprep.subr.mxu0 0.0
        %653 = vmatpush1.msra.mxu0 0.0
        %654 = vmatprep.subr.mxu0 0.0
        %655 = vmatpush1.msra.mxu0 0.0
        %656 = vmatprep.subr.mxu0 0.0
        %657 = vmatpush1.msra.mxu0 0.0
        %658 = vmatprep.subr.mxu0 0.0
        %659 = vmatpush1.msra.mxu0 0.0
        %660 = vmatprep.subr.mxu0 0.0
        %661 = vmatpush1.msra.mxu0 0.0
        %662 = vmatprep.subr.mxu0 0.0
        %663 = vmatpush1.msra.mxu0 0.0
        %664 = vmatprep.subr.mxu0 0.0
        %665 = vmatpush1.msra.mxu0 0.0
        %666 = vmatprep.subr.mxu0 0.0
        %667 = vmatpush1.msra.mxu0 0.0
        %668 = vmatprep.subr.mxu0 0.0
        %669 = vmatpush1.msra.mxu0 0.0
        %670 = vmatprep.subr.mxu0 0.0
        %671 = vmatpush1.msra.mxu0 0.0
        %672 = vmatprep.subr.mxu0 0.0
        %673 = vmatpush1.msra.mxu0 0.0
        %674 = vmatprep.subr.mxu0 0.0
        %675 = vmatpush1.msra.mxu0 0.0
        %676 = vmatprep.subr.mxu0 0.0
        %677 = vmatpush1.msra.mxu0 0.0
        %678 = vmatprep.subr.mxu0 0.0
        %679 = vmatpush1.msra.mxu0 0.0
        %680 = vmatprep.subr.mxu0 0.0
        %681 = vmatpush1.msra.mxu0 0.0
        %682 = vmatprep.subr.mxu0 0.0
        %683 = vmatpush1.msra.mxu0 0.0
        %684 = vmatprep.subr.mxu0 0.0
        %685 = vmatpush1.msra.mxu0 0.0
        %686 = vmatprep.subr.mxu0 0.0
        %687 = vmatpush1.msra.mxu0 0.0
        %688 = vmatprep.subr.mxu0 0.0
        %689 = vmatpush1.msra.mxu0 0.0
        %690 = vmatprep.subr.mxu0 0.0
        %691 = vmatpush1.msra.mxu0 0.0
        %692 = vmatprep.mubr.f32.mxu0 0.0
        %693 = vmatmul.mubr.f32.gmra.mrb[0].mxu0 %v622
        %v694 = vpop.f32.mrb[0].mxu0
        %v695 = vadd.f32 %v618, %v694
        %v696 = vpop.f32.mrb[0].mxu0
        %697 = vdwg.mxu0
        %v698 = vmax.f32 %v695, 0.0
        %699 = vst.msk [vmem:[#allocation3] sm:$0xff] %vm595, 0.0
        %700 = vst.msk [vmem:[#allocation3 + $0x8] sm:$0xff] %vm595, 0.0
        %701 = vst.msk [vmem:[#allocation3 + $0x10] sm:$0xff] %vm595, 0.0
        %702 = vst.msk [vmem:[#allocation3 + $0x18] sm:$0xff] %vm595, 0.0
        %703 = vst.msk [vmem:[#allocation3 + $0x20] sm:$0xf] %vm597, 0.0
        %705 = vrot.lane.b32.xlu0 %v698, 1
        %v706 = vpop.permute.xlu0 %705
        %vm708 = vcmask 130056
        %709 = vst.msk [vmem:[#allocation3] sm:$0xff] %vm708, %v706
        %710 = vst.msk [vmem:[#allocation3 + $0x8] sm:$0xf] %vm603, %v593
        %711 = vst.msk [vmem:[#allocation3 + $0xc] sm:$0xff] %vm595, %v698
        %712 = vst.msk [vmem:[#allocation3 + $0x14] sm:$0xf] %vm597, %v593
        %713 = vrot.lane.b32.xlu0 %v698, 127
        %v714 = vpop.permute.xlu0 %713
        %vm716 = vcmask 121856
        %717 = vst.msk [vmem:[#allocation3 + $0x18] sm:$0xff] %vm716, %v714
        %718 = vst.msk [vmem:[#allocation3 + $0x20] sm:$0xf] %vm609, %v593
        %v719 = vld [vmem:[%s4] sm:$0xff]
        %v720 = vld [vmem:[#allocation3] sm:$0xff]
        %v721 = vld [vmem:[#allocation3 + $0x8] sm:$0xff]
        %v722 = vld [vmem:[#allocation3 + $0x10] sm:$0xff]
        %v723 = vld [vmem:[#allocation3 + $0x18] sm:$0xff]
        %v724 = vld [vmem:[#allocation3 + $0x20] sm:$0xf]
        %v725 = vld [vmem:[%s5] sm:$0xff]
        %727 = vset.pattern.permute.xlu0 0
        %728 = vperm.xlu0 %727, %v725
        %v729 = vpop.permute.xlu0 %728
        %vm731 = vcmask 293888
        %v733 = vsel %vm731, %v719, 0
        %v736 = vsel %vm624, %v724, 0
        %738 = vmatprep.subr.mxu0 0.0
        %739 = vmatpush1.msra.mxu0 %v720
        %740 = vmatprep.subr.mxu0 0.0
        %741 = vmatpush1.msra.mxu0 %v721
        %742 = vmatprep.subr.mxu0 0.0
        %743 = vmatpush1.msra.mxu0 %v722
        %744 = vmatprep.subr.mxu0 0.0
        %745 = vmatpush1.msra.mxu0 %v723
        %746 = vmatprep.subr.mxu0 0.0
        %747 = vmatpush1.msra.mxu0 %v736
        %748 = vmatprep.subr.mxu0 0.0
        %749 = vmatpush1.msra.mxu0 0.0
        %750 = vmatprep.subr.mxu0 0.0
        %751 = vmatpush1.msra.mxu0 0.0
        %752 = vmatprep.subr.mxu0 0.0
        %753 = vmatpush1.msra.mxu0 0.0
        %754 = vmatprep.subr.mxu0 0.0
        %755 = vmatpush1.msra.mxu0 0.0
        %756 = vmatprep.subr.mxu0 0.0
        %757 = vmatpush1.msra.mxu0 0.0
        %758 = vmatprep.subr.mxu0 0.0
        %759 = vmatpush1.msra.mxu0 0.0
        %760 = vmatprep.subr.mxu0 0.0
        %761 = vmatpush1.msra.mxu0 0.0
        %762 = vmatprep.subr.mxu0 0.0
        %763 = vmatpush1.msra.mxu0 0.0
        %764 = vmatprep.subr.mxu0 0.0
        %765 = vmatpush1.msra.mxu0 0.0
        %766 = vmatprep.subr.mxu0 0.0
        %767 = vmatpush1.msra.mxu0 0.0
        %768 = vmatprep.subr.mxu0 0.0
        %769 = vmatpush1.msra.mxu0 0.0
        %770 = vmatprep.subr.mxu0 0.0
        %771 = vmatpush1.msra.mxu0 0.0
        %772 = vmatprep.subr.mxu0 0.0
        %773 = vmatpush1.msra.mxu0 0.0
        %774 = vmatprep.subr.mxu0 0.0
        %775 = vmatpush1.msra.mxu0 0.0
        %776 = vmatprep.subr.mxu0 0.0
        %777 = vmatpush1.msra.mxu0 0.0
        %778 = vmatprep.subr.mxu0 0.0
        %779 = vmatpush1.msra.mxu0 0.0
        %780 = vmatprep.subr.mxu0 0.0
        %781 = vmatpush1.msra.mxu0 0.0
        %782 = vmatprep.subr.mxu0 0.0
        %783 = vmatpush1.msra.mxu0 0.0
        %784 = vmatprep.subr.mxu0 0.0
        %785 = vmatpush1.msra.mxu0 0.0
        %786 = vmatprep.subr.mxu0 0.0
        %787 = vmatpush1.msra.mxu0 0.0
        %788 = vmatprep.subr.mxu0 0.0
        %789 = vmatpush1.msra.mxu0 0.0
        %790 = vmatprep.subr.mxu0 0.0
        %791 = vmatpush1.msra.mxu0 0.0
        %792 = vmatprep.subr.mxu0 0.0
        %793 = vmatpush1.msra.mxu0 0.0
        %794 = vmatprep.subr.mxu0 0.0
        %795 = vmatpush1.msra.mxu0 0.0
        %796 = vmatprep.subr.mxu0 0.0
        %797 = vmatpush1.msra.mxu0 0.0
        %798 = vmatprep.subr.mxu0 0.0
        %799 = vmatpush1.msra.mxu0 0.0
        %800 = vmatprep.subr.mxu0 0.0
        %801 = vmatpush1.msra.mxu0 0.0
        %802 = vmatprep.mubr.f32.mxu0 0.0
        %803 = vmatmul.mubr.f32.gmra.mrb[0].mxu0 %v733
        %v804 = vpop.f32.mrb[0].mxu0
        %v805 = vadd.f32 %v729, %v804
        %v806 = vpop.f32.mrb[0].mxu0
        %807 = vdwg.mxu0
        %v808 = vmax.f32 %v805, 0.0
        %v809 = vld [vmem:[%s6] sm:$0xff]
        %vm810 = vcmask 31744
        %v812 = vsel %vm810, %v809, 0
        %v814 = vsel %vm624, %v588, 0
        %816 = vmatprep.subr.mxu0 0.0
        %817 = vmatpush1.msra.mxu0 %v814
        %818 = vmatprep.subr.mxu0 0.0
        %819 = vmatpush1.msra.mxu0 0.0
        %820 = vmatprep.subr.mxu0 0.0
        %821 = vmatpush1.msra.mxu0 0.0
        %822 = vmatprep.subr.mxu0 0.0
        %823 = vmatpush1.msra.mxu0 0.0
        %824 = vmatprep.subr.mxu0 0.0
        %825 = vmatpush1.msra.mxu0 0.0
        %826 = vmatprep.subr.mxu0 0.0
        %827 = vmatpush1.msra.mxu0 0.0
        %828 = vmatprep.subr.mxu0 0.0
        %829 = vmatpush1.msra.mxu0 0.0
        %830 = vmatprep.subr.mxu0 0.0
        %831 = vmatpush1.msra.mxu0 0.0
        %832 = vmatprep.subr.mxu0 0.0
        %833 = vmatpush1.msra.mxu0 0.0
        %834 = vmatprep.subr.mxu0 0.0
        %835 = vmatpush1.msra.mxu0 0.0
        %836 = vmatprep.subr.mxu0 0.0
        %837 = vmatpush1.msra.mxu0 0.0
        %838 = vmatprep.subr.mxu0 0.0
        %839 = vmatpush1.msra.mxu0 0.0
        %840 = vmatprep.subr.mxu0 0.0
        %841 = vmatpush1.msra.mxu0 0.0
        %842 = vmatprep.subr.mxu0 0.0
        %843 = vmatpush1.msra.mxu0 0.0
        %844 = vmatprep.subr.mxu0 0.0
        %845 = vmatpush1.msra.mxu0 0.0
        %846 = vmatprep.subr.mxu0 0.0
        %847 = vmatpush1.msra.mxu0 0.0
        %848 = vmatprep.subr.mxu0 0.0
        %849 = vmatpush1.msra.mxu0 0.0
        %850 = vmatprep.subr.mxu0 0.0
        %851 = vmatpush1.msra.mxu0 0.0
        %852 = vmatprep.subr.mxu0 0.0
        %853 = vmatpush1.msra.mxu0 0.0
        %854 = vmatprep.subr.mxu0 0.0
        %855 = vmatpush1.msra.mxu0 0.0
        %856 = vmatprep.subr.mxu0 0.0
        %857 = vmatpush1.msra.mxu0 0.0
        %858 = vmatprep.subr.mxu0 0.0
        %859 = vmatpush1.msra.mxu0 0.0
        %860 = vmatprep.subr.mxu0 0.0
        %861 = vmatpush1.msra.mxu0 0.0
        %862 = vmatprep.subr.mxu0 0.0
        %863 = vmatpush1.msra.mxu0 0.0
        %864 = vmatprep.subr.mxu0 0.0
        %865 = vmatpush1.msra.mxu0 0.0
        %866 = vmatprep.subr.mxu0 0.0
        %867 = vmatpush1.msra.mxu0 0.0
        %868 = vmatprep.subr.mxu0 0.0
        %869 = vmatpush1.msra.mxu0 0.0
        %870 = vmatprep.subr.mxu0 0.0
        %871 = vmatpush1.msra.mxu0 0.0
        %872 = vmatprep.subr.mxu0 0.0
        %873 = vmatpush1.msra.mxu0 0.0
        %874 = vmatprep.subr.mxu0 0.0
        %875 = vmatpush1.msra.mxu0 0.0
        %876 = vmatprep.subr.mxu0 0.0
        %877 = vmatpush1.msra.mxu0 0.0
        %878 = vmatprep.subr.mxu0 0.0
        %879 = vmatpush1.msra.mxu0 0.0
        %880 = vmatprep.mubr.f32.mxu0 0.0
        %881 = vmatmul.mubr.f32.gmra.mrb[0].mxu0 %v812
        %v882 = vpop.f32.mrb[0].mxu0
        %v883 = vadd.f32 0.0, %v882
        %v884 = vpop.f32.mrb[0].mxu0
        %885 = vdwg.mxu0
        %v886 = vadd.f32 %v808, %v883
        %v887 = vld [vmem:[%s7] sm:$0xff]
        %889 = vset.pattern.permute.xlu0 0
        %890 = vperm.xlu0 %889, %v887
        %v891 = vpop.permute.xlu0 %890
        %v893 = vadd.f32 %v886, %v891
        %894 = vst.msk [vmem:[#allocation4] sm:$0xff] %vm595, 0.0
        %895 = vst.msk [vmem:[#allocation4 + $0x8] sm:$0xff] %vm595, 0.0
        %896 = vst.msk [vmem:[#allocation4 + $0x10] sm:$0xff] %vm595, 0.0
        %898 = vrot.lane.b32.xlu0 %v893, 2
        %v899 = vpop.permute.xlu0 %898
        %vm901 = vcmask 130064
        %902 = vst.msk [vmem:[#allocation4] sm:$0xff] %vm901, %v899
        %903 = vst.msk [vmem:[#allocation4 + $0x8] sm:$0xff] %vm595, %v893
        %904 = vrot.lane.b32.xlu0 %v893, 126
        %v905 = vpop.permute.xlu0 %904
        %vm907 = vcmask 113664
        %908 = vst.msk [vmem:[#allocation4 + $0x10] sm:$0xff] %vm907, %v905
        %v909 = vld [vmem:[%s8] sm:$0xff]
        %v910 = vld [vmem:[#allocation4] sm:$0xff]
        %v911 = vld [vmem:[#allocation4 + $0x8] sm:$0xff]
        %v912 = vld [vmem:[#allocation4 + $0x10] sm:$0xff]
        %v913 = vld [vmem:[%s9] sm:$0xff]
        %915 = vset.pattern.permute.xlu0 0
        %916 = vperm.xlu0 %915, %v913
        %v917 = vpop.permute.xlu0 %916
        %vm919 = vcmask 195584
        %v921 = vsel %vm919, %v909, 0
        %923 = vmatprep.subr.mxu0 0.0
        %924 = vmatpush1.msra.mxu0 %v910
        %925 = vmatprep.subr.mxu0 0.0
        %926 = vmatpush1.msra.mxu0 %v911
        %927 = vmatprep.subr.mxu0 0.0
        %928 = vmatpush1.msra.mxu0 %v912
        %929 = vmatprep.subr.mxu0 0.0
        %930 = vmatpush1.msra.mxu0 0.0
        %931 = vmatprep.subr.mxu0 0.0
        %932 = vmatpush1.msra.mxu0 0.0
        %933 = vmatprep.subr.mxu0 0.0
        %934 = vmatpush1.msra.mxu0 0.0
        %935 = vmatprep.subr.mxu0 0.0
        %936 = vmatpush1.msra.mxu0 0.0
        %937 = vmatprep.subr.mxu0 0.0
        %938 = vmatpush1.msra.mxu0 0.0
        %939 = vmatprep.subr.mxu0 0.0
        %940 = vmatpush1.msra.mxu0 0.0
        %941 = vmatprep.subr.mxu0 0.0
        %942 = vmatpush1.msra.mxu0 0.0
        %943 = vmatprep.subr.mxu0 0.0
        %944 = vmatpush1.msra.mxu0 0.0
        %945 = vmatprep.subr.mxu0 0.0
        %946 = vmatpush1.msra.mxu0 0.0
        %947 = vmatprep.subr.mxu0 0.0
        %948 = vmatpush1.msra.mxu0 0.0
        %949 = vmatprep.subr.mxu0 0.0
        %950 = vmatpush1.msra.mxu0 0.0
        %951 = vmatprep.subr.mxu0 0.0
        %952 = vmatpush1.msra.mxu0 0.0
        %953 = vmatprep.subr.mxu0 0.0
        %954 = vmatpush1.msra.mxu0 0.0
        %955 = vmatprep.subr.mxu0 0.0
        %956 = vmatpush1.msra.mxu0 0.0
        %957 = vmatprep.subr.mxu0 0.0
        %958 = vmatpush1.msra.mxu0 0.0
        %959 = vmatprep.subr.mxu0 0.0
        %960 = vmatpush1.msra.mxu0 0.0
        %961 = vmatprep.subr.mxu0 0.0
        %962 = vmatpush1.msra.mxu0 0.0
        %963 = vmatprep.subr.mxu0 0.0
        %964 = vmatpush1.msra.mxu0 0.0
        %965 = vmatprep.subr.mxu0 0.0
        %966 = vmatpush1.msra.mxu0 0.0
        %967 = vmatprep.subr.mxu0 0.0
        %968 = vmatpush1.msra.mxu0 0.0
        %969 = vmatprep.subr.mxu0 0.0
        %970 = vmatpush1.msra.mxu0 0.0
        %971 = vmatprep.subr.mxu0 0.0
        %972 = vmatpush1.msra.mxu0 0.0
        %973 = vmatprep.subr.mxu0 0.0
        %974 = vmatpush1.msra.mxu0 0.0
        %975 = vmatprep.subr.mxu0 0.0
        %976 = vmatpush1.msra.mxu0 0.0
        %977 = vmatprep.subr.mxu0 0.0
        %978 = vmatpush1.msra.mxu0 0.0
        %979 = vmatprep.subr.mxu0 0.0
        %980 = vmatpush1.msra.mxu0 0.0
        %981 = vmatprep.subr.mxu0 0.0
        %982 = vmatpush1.msra.mxu0 0.0
        %983 = vmatprep.subr.mxu0 0.0
        %984 = vmatpush1.msra.mxu0 0.0
        %985 = vmatprep.subr.mxu0 0.0
        %986 = vmatpush1.msra.mxu0 0.0
        %987 = vmatprep.mubr.f32.mxu0 0.0
        %988 = vmatmul.mubr.f32.gmra.mrb[0].mxu0 %v921
        %v989 = vpop.f32.mrb[0].mxu0
        %v990 = vadd.f32 %v917, %v989
        %v991 = vpop.f32.mrb[0].mxu0
        %992 = vdwg.mxu0
        %v993 = vmax.f32 %v990, 0.0
        %994 = vst.msk [vmem:[#allocation5] sm:$0xff] %vm595, 0.0
        %995 = vst.msk [vmem:[#allocation5 + $0x8] sm:$0xff] %vm595, 0.0
        %996 = vst.msk [vmem:[#allocation5 + $0x10] sm:$0xff] %vm595, 0.0
        %997 = vst.msk [vmem:[#allocation5 + $0x18] sm:$0xff] %vm595, 0.0
        %998 = vst.msk [vmem:[#allocation5 + $0x20] sm:$0xf] %vm597, 0.0
        %1000 = vrot.lane.b32.xlu0 %v993, 2
        %v1001 = vpop.permute.xlu0 %1000
        %1003 = vst.msk [vmem:[#allocation5] sm:$0xff] %vm901, %v1001
        %vm1004 = vcmask 125968
        %1005 = vst.msk [vmem:[#allocation5 + $0x8] sm:$0xf] %vm1004, %v593
        %1006 = vst.msk [vmem:[#allocation5 + $0xc] sm:$0xff] %vm595, %v993
        %1007 = vst.msk [vmem:[#allocation5 + $0x14] sm:$0xf] %vm597, %v593
        %1008 = vrot.lane.b32.xlu0 %v993, 126
        %v1009 = vpop.permute.xlu0 %1008
        %1011 = vst.msk [vmem:[#allocation5 + $0x18] sm:$0xff] %vm907, %v1009
        %vm1012 = vcmask 109568
        %1013 = vst.msk [vmem:[#allocation5 + $0x20] sm:$0xf] %vm1012, %v593
        %v1014 = vld [vmem:[%s10] sm:$0xff]
        %v1015 = vld [vmem:[#allocation5] sm:$0xff]
        %v1016 = vld [vmem:[#allocation5 + $0x8] sm:$0xff]
        %v1017 = vld [vmem:[#allocation5 + $0x10] sm:$0xff]
        %v1018 = vld [vmem:[#allocation5 + $0x18] sm:$0xff]
        %v1019 = vld [vmem:[#allocation5 + $0x20] sm:$0xf]
        %v1020 = vld [vmem:[%s11] sm:$0xff]
        %1022 = vset.pattern.permute.xlu0 0
        %1023 = vperm.xlu0 %1022, %v1020
        %v1024 = vpop.permute.xlu0 %1023
        %v1027 = vsel %vm731, %v1014, 0
        %v1030 = vsel %vm624, %v1019, 0
        %1032 = vmatprep.subr.mxu0 0.0
        %1033 = vmatpush1.msra.mxu0 %v1015
        %1034 = vmatprep.subr.mxu0 0.0
        %1035 = vmatpush1.msra.mxu0 %v1016
        %1036 = vmatprep.subr.mxu0 0.0
        %1037 = vmatpush1.msra.mxu0 %v1017
        %1038 = vmatprep.subr.mxu0 0.0
        %1039 = vmatpush1.msra.mxu0 %v1018
        %1040 = vmatprep.subr.mxu0 0.0
        %1041 = vmatpush1.msra.mxu0 %v1030
        %1042 = vmatprep.subr.mxu0 0.0
        %1043 = vmatpush1.msra.mxu0 0.0
        %1044 = vmatprep.subr.mxu0 0.0
        %1045 = vmatpush1.msra.mxu0 0.0
        %1046 = vmatprep.subr.mxu0 0.0
        %1047 = vmatpush1.msra.mxu0 0.0
        %1048 = vmatprep.subr.mxu0 0.0
        %1049 = vmatpush1.msra.mxu0 0.0
        %1050 = vmatprep.subr.mxu0 0.0
        %1051 = vmatpush1.msra.mxu0 0.0
        %1052 = vmatprep.subr.mxu0 0.0
        %1053 = vmatpush1.msra.mxu0 0.0
        %1054 = vmatprep.subr.mxu0 0.0
        %1055 = vmatpush1.msra.mxu0 0.0
        %1056 = vmatprep.subr.mxu0 0.0
        %1057 = vmatpush1.msra.mxu0 0.0
        %1058 = vmatprep.subr.mxu0 0.0
        %1059 = vmatpush1.msra.mxu0 0.0
        %1060 = vmatprep.subr.mxu0 0.0
        %1061 = vmatpush1.msra.mxu0 0.0
        %1062 = vmatprep.subr.mxu0 0.0
        %1063 = vmatpush1.msra.mxu0 0.0
        %1064 = vmatprep.subr.mxu0 0.0
        %1065 = vmatpush1.msra.mxu0 0.0
        %1066 = vmatprep.subr.mxu0 0.0
        %1067 = vmatpush1.msra.mxu0 0.0
        %1068 = vmatprep.subr.mxu0 0.0
        %1069 = vmatpush1.msra.mxu0 0.0
        %1070 = vmatprep.subr.mxu0 0.0
        %1071 = vmatpush1.msra.mxu0 0.0
        %1072 = vmatprep.subr.mxu0 0.0
        %1073 = vmatpush1.msra.mxu0 0.0
        %1074 = vmatprep.subr.mxu0 0.0
        %1075 = vmatpush1.msra.mxu0 0.0
        %1076 = vmatprep.subr.mxu0 0.0
        %1077 = vmatpush1.msra.mxu0 0.0
        %1078 = vmatprep.subr.mxu0 0.0
        %1079 = vmatpush1.msra.mxu0 0.0
        %1080 = vmatprep.subr.mxu0 0.0
        %1081 = vmatpush1.msra.mxu0 0.0
        %1082 = vmatprep.subr.mxu0 0.0
        %1083 = vmatpush1.msra.mxu0 0.0
        %1084 = vmatprep.subr.mxu0 0.0
        %1085 = vmatpush1.msra.mxu0 0.0
        %1086 = vmatprep.subr.mxu0 0.0
        %1087 = vmatpush1.msra.mxu0 0.0
        %1088 = vmatprep.subr.mxu0 0.0
        %1089 = vmatpush1.msra.mxu0 0.0
        %1090 = vmatprep.subr.mxu0 0.0
        %1091 = vmatpush1.msra.mxu0 0.0
        %1092 = vmatprep.subr.mxu0 0.0
        %1093 = vmatpush1.msra.mxu0 0.0
        %1094 = vmatprep.subr.mxu0 0.0
        %1095 = vmatpush1.msra.mxu0 0.0
        %1096 = vmatprep.mubr.f32.mxu0 0.0
        %1097 = vmatmul.mubr.f32.gmra.mrb[0].mxu0 %v1027
        %v1098 = vpop.f32.mrb[0].mxu0
        %v1099 = vadd.f32 %v1024, %v1098
        %v1100 = vpop.f32.mrb[0].mxu0
        %1101 = vdwg.mxu0
        %v1102 = vmax.f32 %v1099, 0.0
        %v1103 = vadd.f32 %v1102, %v893
        %1104 = vst.msk [vmem:[#allocation6] sm:$0xff] %vm595, 0.0
        %1105 = vst.msk [vmem:[#allocation6 + $0x8] sm:$0xff] %vm595, 0.0
        %1106 = vst.msk [vmem:[#allocation6 + $0x10] sm:$0xff] %vm595, 0.0
        %1108 = vrot.lane.b32.xlu0 %v1103, 4
        %v1109 = vpop.permute.xlu0 %1108
        %vm1111 = vcmask 130080
        %1112 = vst.msk [vmem:[#allocation6] sm:$0xff] %vm1111, %v1109
        %1113 = vst.msk [vmem:[#allocation6 + $0x8] sm:$0xff] %vm595, %v1103
        %1114 = vrot.lane.b32.xlu0 %v1103, 124
        %v1115 = vpop.permute.xlu0 %1114
        %1117 = vst.msk [vmem:[#allocation6 + $0x10] sm:$0xff] %vm620, %v1115
        %v1118 = vld [vmem:[%s12] sm:$0xf]
        %v1119 = vld [vmem:[#allocation6] sm:$0xff]
        %v1120 = vld [vmem:[#allocation6 + $0x8] sm:$0xff]
        %v1121 = vld [vmem:[#allocation6 + $0x10] sm:$0xff]
        %v1122 = vld [vmem:[%s13] sm:$0xf]
        %1124 = vset.pattern.permute.xlu0 0
        %1125 = vperm.xlu0 %1124, %v1122
        %v1126 = vpop.permute.xlu0 %1125
        %v1129 = vsel %vm919, %v1118, 0
        %1131 = vmatprep.subr.mxu0 0.0
        %1132 = vmatpush1.msra.mxu0 %v1119
        %1133 = vmatprep.subr.mxu0 0.0
        %1134 = vmatpush1.msra.mxu0 %v1120
        %1135 = vmatprep.subr.mxu0 0.0
        %1136 = vmatpush1.msra.mxu0 %v1121
        %1137 = vmatprep.subr.mxu0 0.0
        %1138 = vmatpush1.msra.mxu0 0.0
        %1139 = vmatprep.subr.mxu0 0.0
        %1140 = vmatpush1.msra.mxu0 0.0
        %1141 = vmatprep.subr.mxu0 0.0
        %1142 = vmatpush1.msra.mxu0 0.0
        %1143 = vmatprep.subr.mxu0 0.0
        %1144 = vmatpush1.msra.mxu0 0.0
        %1145 = vmatprep.subr.mxu0 0.0
        %1146 = vmatpush1.msra.mxu0 0.0
        %1147 = vmatprep.subr.mxu0 0.0
        %1148 = vmatpush1.msra.mxu0 0.0
        %1149 = vmatprep.subr.mxu0 0.0
        %1150 = vmatpush1.msra.mxu0 0.0
        %1151 = vmatprep.subr.mxu0 0.0
        %1152 = vmatpush1.msra.mxu0 0.0
        %1153 = vmatprep.subr.mxu0 0.0
        %1154 = vmatpush1.msra.mxu0 0.0
        %1155 = vmatprep.subr.mxu0 0.0
        %1156 = vmatpush1.msra.mxu0 0.0
        %1157 = vmatprep.subr.mxu0 0.0
        %1158 = vmatpush1.msra.mxu0 0.0
        %1159 = vmatprep.subr.mxu0 0.0
        %1160 = vmatpush1.msra.mxu0 0.0
        %1161 = vmatprep.subr.mxu0 0.0
        %1162 = vmatpush1.msra.mxu0 0.0
        %1163 = vmatprep.subr.mxu0 0.0
        %1164 = vmatpush1.msra.mxu0 0.0
        %1165 = vmatprep.subr.mxu0 0.0
        %1166 = vmatpush1.msra.mxu0 0.0
        %1167 = vmatprep.subr.mxu0 0.0
        %1168 = vmatpush1.msra.mxu0 0.0
        %1169 = vmatprep.subr.mxu0 0.0
        %1170 = vmatpush1.msra.mxu0 0.0
        %1171 = vmatprep.subr.mxu0 0.0
        %1172 = vmatpush1.msra.mxu0 0.0
        %1173 = vmatprep.subr.mxu0 0.0
        %1174 = vmatpush1.msra.mxu0 0.0
        %1175 = vmatprep.subr.mxu0 0.0
        %1176 = vmatpush1.msra.mxu0 0.0
        %1177 = vmatprep.subr.mxu0 0.0
        %1178 = vmatpush1.msra.mxu0 0.0
        %1179 = vmatprep.subr.mxu0 0.0
        %1180 = vmatpush1.msra.mxu0 0.0
        %1181 = vmatprep.subr.mxu0 0.0
        %1182 = vmatpush1.msra.mxu0 0.0
        %1183 = vmatprep.subr.mxu0 0.0
        %1184 = vmatpush1.msra.mxu0 0.0
        %1185 = vmatprep.subr.mxu0 0.0
        %1186 = vmatpush1.msra.mxu0 0.0
        %1187 = vmatprep.subr.mxu0 0.0
        %1188 = vmatpush1.msra.mxu0 0.0
        %1189 = vmatprep.subr.mxu0 0.0
        %1190 = vmatpush1.msra.mxu0 0.0
        %1191 = vmatprep.subr.mxu0 0.0
        %1192 = vmatpush1.msra.mxu0 0.0
        %1193 = vmatprep.subr.mxu0 0.0
        %1194 = vmatpush1.msra.mxu0 0.0
        %1195 = vmatprep.mubr.f32.mxu0 0.0
        %1196 = vmatmul.mubr.f32.gmra.mrb[0].mxu0 %v1129
        %v1197 = vpop.f32.mrb[0].mxu0
        %v1198 = vadd.f32 %v1126, %v1197
        %v1199 = vpop.f32.mrb[0].mxu0
        %1200 = vdwg.mxu0
        %v1201 = vmax.f32 %v1198, 0.0
        %1202 = vst.msk [vmem:[#allocation7] sm:$0xff] %vm595, 0.0
        %1203 = vst.msk [vmem:[#allocation7 + $0x8] sm:$0xff] %vm595, 0.0
        %1204 = vst.msk [vmem:[#allocation7 + $0x10] sm:$0xff] %vm595, 0.0
        %1206 = vrot.lane.b32.xlu0 %v1201, 4
        %v1207 = vpop.permute.xlu0 %1206
        %vm1209 = vcmask 125984
        %1210 = vst.msk [vmem:[#allocation7] sm:$0xf] %vm1209, %v1207
        %1211 = vst.msk [vmem:[#allocation7 + $0x4] sm:$0xf] %vm1209, %v593
        %1212 = vst.msk [vmem:[#allocation7 + $0x8] sm:$0xf] %vm597, %v1201
        %1213 = vst.msk [vmem:[#allocation7 + $0xc] sm:$0xf] %vm597, %v593
        %1214 = vrot.lane.b32.xlu0 %v1201, 124
        %v1215 = vpop.permute.xlu0 %1214
        %vm1217 = vcmask 93184
        %1218 = vst.msk [vmem:[#allocation7 + $0x10] sm:$0xf] %vm1217, %v1215
        %1219 = vst.msk [vmem:[#allocation7 + $0x14] sm:$0xf] %vm1217, %v593
        %v1220 = vld [vmem:[%s14] sm:$0xf]
        %v1221 = vld [vmem:[#allocation7] sm:$0xff]
        %v1222 = vld [vmem:[#allocation7 + $0x8] sm:$0xff]
        %v1223 = vld [vmem:[#allocation7 + $0x10] sm:$0xff]
        %v1224 = vld [vmem:[%s15] sm:$0xf]
        %1226 = vset.pattern.permute.xlu0 0
        %1227 = vperm.xlu0 %1226, %v1224
        %v1228 = vpop.permute.xlu0 %1227
        %v1231 = vsel %vm919, %v1220, 0
        %1233 = vmatprep.subr.mxu0 0.0
        %1234 = vmatpush1.msra.mxu0 %v1221
        %1235 = vmatprep.subr.mxu0 0.0
        %1236 = vmatpush1.msra.mxu0 %v1222
        %1237 = vmatprep.subr.mxu0 0.0
        %1238 = vmatpush1.msra.mxu0 %v1223
        %1239 = vmatprep.subr.mxu0 0.0
        %1240 = vmatpush1.msra.mxu0 0.0
        %1241 = vmatprep.subr.mxu0 0.0
        %1242 = vmatpush1.msra.mxu0 0.0
        %1243 = vmatprep.subr.mxu0 0.0
        %1244 = vmatpush1.msra.mxu0 0.0
        %1245 = vmatprep.subr.mxu0 0.0
        %1246 = vmatpush1.msra.mxu0 0.0
        %1247 = vmatprep.subr.mxu0 0.0
        %1248 = vmatpush1.msra.mxu0 0.0
        %1249 = vmatprep.subr.mxu0 0.0
        %1250 = vmatpush1.msra.mxu0 0.0
        %1251 = vmatprep.subr.mxu0 0.0
        %1252 = vmatpush1.msra.mxu0 0.0
        %1253 = vmatprep.subr.mxu0 0.0
        %1254 = vmatpush1.msra.mxu0 0.0
        %1255 = vmatprep.subr.mxu0 0.0
        %1256 = vmatpush1.msra.mxu0 0.0
        %1257 = vmatprep.subr.mxu0 0.0
        %1258 = vmatpush1.msra.mxu0 0.0
        %1259 = vmatprep.subr.mxu0 0.0
        %1260 = vmatpush1.msra.mxu0 0.0
        %1261 = vmatprep.subr.mxu0 0.0
        %1262 = vmatpush1.msra.mxu0 0.0
        %1263 = vmatprep.subr.mxu0 0.0
        %1264 = vmatpush1.msra.mxu0 0.0
        %1265 = vmatprep.subr.mxu0 0.0
        %1266 = vmatpush1.msra.mxu0 0.0
        %1267 = vmatprep.subr.mxu0 0.0
        %1268 = vmatpush1.msra.mxu0 0.0
        %1269 = vmatprep.subr.mxu0 0.0
        %1270 = vmatpush1.msra.mxu0 0.0
        %1271 = vmatprep.subr.mxu0 0.0
        %1272 = vmatpush1.msra.mxu0 0.0
        %1273 = vmatprep.subr.mxu0 0.0
        %1274 = vmatpush1.msra.mxu0 0.0
        %1275 = vmatprep.subr.mxu0 0.0
        %1276 = vmatpush1.msra.mxu0 0.0
        %1277 = vmatprep.subr.mxu0 0.0
        %1278 = vmatpush1.msra.mxu0 0.0
        %1279 = vmatprep.subr.mxu0 0.0
        %1280 = vmatpush1.msra.mxu0 0.0
        %1281 = vmatprep.subr.mxu0 0.0
        %1282 = vmatpush1.msra.mxu0 0.0
        %1283 = vmatprep.subr.mxu0 0.0
        %1284 = vmatpush1.msra.mxu0 0.0
        %1285 = vmatprep.subr.mxu0 0.0
        %1286 = vmatpush1.msra.mxu0 0.0
        %1287 = vmatprep.subr.mxu0 0.0
        %1288 = vmatpush1.msra.mxu0 0.0
        %1289 = vmatprep.subr.mxu0 0.0
        %1290 = vmatpush1.msra.mxu0 0.0
        %1291 = vmatprep.subr.mxu0 0.0
        %1292 = vmatpush1.msra.mxu0 0.0
        %1293 = vmatprep.subr.mxu0 0.0
        %1294 = vmatpush1.msra.mxu0 0.0
        %1295 = vmatprep.subr.mxu0 0.0
        %1296 = vmatpush1.msra.mxu0 0.0
        %1297 = vmatprep.mubr.f32.mxu0 0.0
        %1298 = vmatmul.mubr.f32.gmra.mrb[0].mxu0 %v1231
        %v1299 = vpop.f32.mrb[0].mxu0
        %v1300 = vadd.f32 %v1228, %v1299
        %v1301 = vpop.f32.mrb[0].mxu0
        %1302 = vdwg.mxu0
        %v1303 = vmax.f32 %v1300, 0.0
        %v1304 = vld [vmem:[%s16] sm:$0xf]
        %vm1305 = vcmask 64512
        %v1307 = vsel %vm1305, %v1304, 0
        %1309 = vmatprep.subr.mxu0 0.0
        %1310 = vmatpush1.msra.mxu0 %v1103
        %1311 = vmatprep.subr.mxu0 0.0
        %1312 = vmatpush1.msra.mxu0 0.0
        %1313 = vmatprep.subr.mxu0 0.0
        %1314 = vmatpush1.msra.mxu0 0.0
        %1315 = vmatprep.subr.mxu0 0.0
        %1316 = vmatpush1.msra.mxu0 0.0
        %1317 = vmatprep.subr.mxu0 0.0
        %1318 = vmatpush1.msra.mxu0 0.0
        %1319 = vmatprep.subr.mxu0 0.0
        %1320 = vmatpush1.msra.mxu0 0.0
        %1321 = vmatprep.subr.mxu0 0.0
        %1322 = vmatpush1.msra.mxu0 0.0
        %1323 = vmatprep.subr.mxu0 0.0
        %1324 = vmatpush1.msra.mxu0 0.0
        %1325 = vmatprep.subr.mxu0 0.0
        %1326 = vmatpush1.msra.mxu0 0.0
        %1327 = vmatprep.subr.mxu0 0.0
        %1328 = vmatpush1.msra.mxu0 0.0
        %1329 = vmatprep.subr.mxu0 0.0
        %1330 = vmatpush1.msra.mxu0 0.0
        %1331 = vmatprep.subr.mxu0 0.0
        %1332 = vmatpush1.msra.mxu0 0.0
        %1333 = vmatprep.subr.mxu0 0.0
        %1334 = vmatpush1.msra.mxu0 0.0
        %1335 = vmatprep.subr.mxu0 0.0
        %1336 = vmatpush1.msra.mxu0 0.0
        %1337 = vmatprep.subr.mxu0 0.0
        %1338 = vmatpush1.msra.mxu0 0.0
        %1339 = vmatprep.subr.mxu0 0.0
        %1340 = vmatpush1.msra.mxu0 0.0
        %1341 = vmatprep.subr.mxu0 0.0
        %1342 = vmatpush1.msra.mxu0 0.0
        %1343 = vmatprep.subr.mxu0 0.0
        %1344 = vmatpush1.msra.mxu0 0.0
        %1345 = vmatprep.subr.mxu0 0.0
        %1346 = vmatpush1.msra.mxu0 0.0
        %1347 = vmatprep.subr.mxu0 0.0
        %1348 = vmatpush1.msra.mxu0 0.0
        %1349 = vmatprep.subr.mxu0 0.0
        %1350 = vmatpush1.msra.mxu0 0.0
        %1351 = vmatprep.subr.mxu0 0.0
        %1352 = vmatpush1.msra.mxu0 0.0
        %1353 = vmatprep.subr.mxu0 0.0
        %1354 = vmatpush1.msra.mxu0 0.0
        %1355 = vmatprep.subr.mxu0 0.0
        %1356 = vmatpush1.msra.mxu0 0.0
        %1357 = vmatprep.subr.mxu0 0.0
        %1358 = vmatpush1.msra.mxu0 0.0
        %1359 = vmatprep.subr.mxu0 0.0
        %1360 = vmatpush1.msra.mxu0 0.0
        %1361 = vmatprep.subr.mxu0 0.0
        %1362 = vmatpush1.msra.mxu0 0.0
        %1363 = vmatprep.subr.mxu0 0.0
        %1364 = vmatpush1.msra.mxu0 0.0
        %1365 = vmatprep.subr.mxu0 0.0
        %1366 = vmatpush1.msra.mxu0 0.0
        %1367 = vmatprep.subr.mxu0 0.0
        %1368 = vmatpush1.msra.mxu0 0.0
        %1369 = vmatprep.subr.mxu0 0.0
        %1370 = vmatpush1.msra.mxu0 0.0
        %1371 = vmatprep.subr.mxu0 0.0
        %1372 = vmatpush1.msra.mxu0 0.0
        %1373 = vmatprep.mubr.f32.mxu0 0.0
        %1374 = vmatmul.mubr.f32.gmra.mrb[0].mxu0 %v1307
        %v1375 = vpop.f32.mrb[0].mxu0
        %v1376 = vadd.f32 0.0, %v1375
        %v1377 = vpop.f32.mrb[0].mxu0
        %1378 = vdwg.mxu0
        %v1379 = vadd.f32 %v1303, %v1376
        %v1380 = vld [vmem:[%s17] sm:$0xf]
        %1382 = vset.pattern.permute.xlu0 0
        %1383 = vperm.xlu0 %1382, %v1380
        %v1384 = vpop.permute.xlu0 %1383
        %v1386 = vadd.f32 %v1379, %v1384
        %1387 = vst.msk [vmem:[%s579] sm:$0xf] %vm597, %v1386
        %s1388 = sand.u32 %s428, 1
        %s1389 = scalar_lea.sflag [#allocation9], %s1388
        %s1390 = sand.u32 %s428, 1
        %s1391 = smul.addr %s1390, 4
        %s1392 = scalar_lea.vmem [#allocation8], %s1391
        // Predicated region
        $region93: #{forward.1} parent=91 // pred_check
          %p1393 = pneg %p438
        $region94: #{forward.1} parent=91 // pred_check_branch
          %1395 = sbr.rel (%p1393) target = $region96
        $region95: #{forward.1} parent=91 // pred_region
          %s1397 = ssub.s32 64, 64
          %1398 = vsyncadd %s1389, %s1397
          %s1399 = smul.addr %s32, 64
          %s1400 = scalar_lea.hbm %s18, %s1399
          %s1402 = sshll.u32 %s1392, 4
          %s1403 = int_to_ptr.vmem [resolvable:$true] %s1402
          %1405 = dma.vmem_to_hbm [thread:$0]  %s1403, 64, %s1400, %s1389
        $region96: #{forward.1} parent=91 // pred_fallthru
          _
      $region92: #{forward.1} parent=5 // pred_fallthru
        _
      %p1406 = scmp.le.s32.totalorder 2, %s27
      // Predicated region
      $region97: #{forward.1} parent=5 // pred_check
        %p1407 = pneg %p1406
      $region98: #{forward.1} parent=5 // pred_check_branch
        %1409 = sbr.rel (%p1407) target = $region100
      $region99: #{forward.1} parent=5 // pred_region
        %s1410 = ssub.s32 %s27, 2
        // Predicated region
        $region101: #{forward.1} parent=99 // pred_check
          %p1411 = pneg %p444
        $region102: #{forward.1} parent=99 // pred_check_branch
          %1413 = sbr.rel (%p1411) target = $region104
        $region103: #{forward.1} parent=99 // pred_region
          %s1414 = sand.u32 %s429, 1
          %s1415 = scalar_lea.sflag [#allocation9], %s1414
          %s1416 = sand.u32 %s429, 1
          %s1417 = smul.addr %s1416, 4
          %s1418 = scalar_lea.vmem [#allocation8], %s1417
          %1419 = dma.done %s1415, 64
        $region104: #{forward.1} parent=99 // pred_fallthru
          _
      $region100: #{forward.1} parent=5 // pred_fallthru
        _
    $region6: #{forward.1} parent=1 // loop_footer
      %s31 = sadd.s32 1, %s27
    $region7: #{forward.1} parent=1 // loop_footer_branch
      %26 = sbr.rel target = $region3
    $region8: #{forward.1} parent=1 // loop_exit
      _
    %1420 = vsyncpa [#allocation9], 1
    %s1421 = scalar_lea.sflag [#allocation9], 1
    %1422 = vsyncpa %s1421, 1

</llo_original>
